<compile_context>
chip_gen: v7x
topology: tpu7x:2x2x1
jax: 0.10.0
libtpu: 0.0.40
codegen_flags: <defaults>
</compile_context>

<pallas_src>
import jax
import jax.numpy as jnp
from jax import lax
from jax.experimental import pallas as pl
from jax.experimental.pallas import tpu as pltpu


def _round_up(x, m):
    return ((x + m - 1) // m) * m


def ctx_aux_head_forward(x_nchw, params, *, tile_h=32):
    """x_nchw: (N, Cin, H, W) float32. Returns (N, num_classes, H, W) float32."""
    w1 = params["conv1_w"]      # (Cmid, Cin, 3, 3)
    gamma = params["bn_gamma"]  # (Cmid,)
    beta = params["bn_beta"]    # (Cmid,)
    mean = params["bn_mean"]    # (Cmid,)
    var = params["bn_var"]      # (Cmid,)
    w2 = params["conv2_w"]      # (NCLS, Cmid, 1, 1)
    b2 = params["conv2_b"]      # (NCLS,)
    eps = 1e-5

    N, Cin, H, W = x_nchw.shape
    Cmid = w1.shape[0]
    NCLS = w2.shape[0]

    # Row tiling: tile_h output rows per grid step (+2 halo input rows).
    tile_h = max(1, min(tile_h, H))
    n_tiles = (H + tile_h - 1) // tile_h
    h_pad = n_tiles * tile_h
    ws = W + 2                                   # padded row stride
    p_out = _round_up(tile_h * ws, 128)          # lane-dense output tile width
    p_in = _round_up(2 * ws + 2 + p_out, 128)    # covers the largest tap shift

    # ---- parameter prep (tiny tensors, plain JAX) ----
    scale = gamma / jnp.sqrt(var + eps)                              # f32 BN fold
    w1f = jnp.transpose(w1, (2, 3, 0, 1)) * scale[None, None, :, None]
    w1f = w1f.astype(jnp.bfloat16)                                   # (3,3,Cmid,Cin)
    bn_bias = (beta - mean * scale).reshape(Cmid, 1).astype(jnp.float32)
    w2m = w2[:, :, 0, 0].astype(jnp.bfloat16)                        # (NCLS, Cmid)
    b2m = b2.reshape(NCLS, 1).astype(jnp.float32)

    # ---- activation prep: bf16 cast, zero pad, overlapping row tiles ----
    xb = x_nchw.astype(jnp.bfloat16)
    xpad = jnp.pad(xb, ((0, 0), (0, 0), (1, 1 + h_pad - H), (1, 1)))
    # (N, Cin, h_pad+2, ws); tile t needs padded rows [t*tile_h, t*tile_h+tile_h+2)
    tiles = [xpad[:, :, t * tile_h: t * tile_h + tile_h + 2, :]
             for t in range(n_tiles)]
    xslab = jnp.stack(tiles, axis=1)             # (N, n_tiles, Cin, tile_h+2, ws)
    xslab = xslab.reshape(N, n_tiles, Cin, (tile_h + 2) * ws)
    xslab = jnp.pad(xslab, ((0, 0), (0, 0), (0, 0),
                            (0, p_in - (tile_h + 2) * ws)))
    # TODO(synk): a fully zero-copy variant would DMA halo rows straight from
    # the padded image with memory_space=pl.ANY; the overlapping-slab build
    # above already keeps HBM traffic at ~1x activation bytes.

    def kernel(x_ref, w1_ref, bnb_ref, w2_ref, b2_ref, out_ref):
        # x_ref:   (Cin, p_in)       bf16  one image's row tile (+halo), flat
        # w1_ref:  (3, 3, Cmid, Cin) bf16  BN scale folded in
        # bnb_ref: (Cmid, 1)         f32   folded BN bias
        # w2_ref:  (NCLS, Cmid)      bf16  1x1 conv weight
        # b2_ref:  (NCLS, 1)         f32   1x1 conv bias
        # out_ref: (NCLS, p_out)     f32
        acc = jnp.zeros((Cmid, p_out), jnp.float32)
        for kh in range(3):
            for kw in range(3):
                # Shifted tap view: output pixel f uses input pixel f + kh*ws + kw.
                xs = x_ref[:, pl.ds(kh * ws + kw, p_out)]        # (Cin, p_out)
                acc = acc + jnp.dot(w1_ref[kh, kw], xs,
                                    preferred_element_type=jnp.float32)
        y = jnp.maximum(acc + bnb_ref[...], 0.0)                 # BN bias + ReLU
        # Dropout(p=0.1) is identity at inference time.
        # TODO(synk): training-mode dropout would use pltpu.prng_seed/prng_random_bits.
        out = jnp.dot(w2_ref[...], y.astype(jnp.bfloat16),
                      preferred_element_type=jnp.float32) + b2_ref[...]
        out_ref[...] = out

    out = pl.pallas_call(
        kernel,
        out_shape=jax.ShapeDtypeStruct((N, n_tiles, NCLS, p_out), jnp.float32),
        grid=(N, n_tiles),
        in_specs=[
            pl.BlockSpec((None, None, Cin, p_in), lambda n, t: (n, t, 0, 0)),
            pl.BlockSpec((3, 3, Cmid, Cin), lambda n, t: (0, 0, 0, 0)),
            pl.BlockSpec((Cmid, 1), lambda n, t: (0, 0)),
            pl.BlockSpec((NCLS, Cmid), lambda n, t: (0, 0)),
            pl.BlockSpec((NCLS, 1), lambda n, t: (0, 0)),
        ],
        out_specs=pl.BlockSpec((None, None, NCLS, p_out),
                               lambda n, t: (n, t, 0, 0)),
        compiler_params=pltpu.CompilerParams(
            dimension_semantics=("parallel", "parallel")),
    )(xslab, w1f, bn_bias, w2m, b2m)

    # (N, n_tiles, NCLS, p_out) -> (N, NCLS, H, W).  Everything past tile_h*ws
    # per tile and past H / W globally is padding; the reorder below touches
    # only exact-size (unpadded-class) f32 logits.
    out = out[..., : tile_h * ws].reshape(N, n_tiles, NCLS, tile_h, ws)
    out = out.transpose(0, 2, 1, 3, 4).reshape(N, NCLS, h_pad, ws)
    return out[:, :, :H, :W]


def ctx_aux_head_reference(x_nchw, params):
    """Plain-JAX f32 reference (inference mode) for sanity checking."""
    w1, gamma, beta, mean, var, w2, b2 = (
        params["conv1_w"], params["bn_gamma"], params["bn_beta"],
        params["bn_mean"], params["bn_var"], params["conv2_w"], params["conv2_b"])
    eps = 1e-5
    y = lax.conv_general_dilated(
        x_nchw, w1, window_strides=(1, 1), padding=((1, 1), (1, 1)),
        dimension_numbers=("NCHW", "OIHW", "NCHW"))
    scale = (gamma / jnp.sqrt(var + eps)).reshape(1, -1, 1, 1)
    shift = (beta - mean * gamma / jnp.sqrt(var + eps)).reshape(1, -1, 1, 1)
    y = jnp.maximum(y * scale + shift, 0.0)
    z = lax.conv_general_dilated(
        y, w2, window_strides=(1, 1), padding=((0, 0), (0, 0)),
        dimension_numbers=("NCHW", "OIHW", "NCHW"))
    return z + b2.reshape(1, -1, 1, 1)


def init_params(key, in_channels, mid_channels, num_classes):
    ks = jax.random.split(key, 7)
    return {
        "conv1_w": 0.2 * jax.random.normal(
            ks[0], (mid_channels, in_channels, 3, 3), jnp.float32),
        "bn_gamma": jax.random.uniform(
            ks[1], (mid_channels,), jnp.float32, 0.5, 1.5),
        "bn_beta": 0.1 * jax.random.normal(ks[2], (mid_channels,), jnp.float32),
        "bn_mean": 0.1 * jax.random.normal(ks[3], (mid_channels,), jnp.float32),
        "bn_var": jax.random.uniform(
            ks[4], (mid_channels,), jnp.float32, 0.5, 1.5),
        "conv2_w": 0.2 * jax.random.normal(
            ks[5], (num_classes, mid_channels, 1, 1), jnp.float32),
        "conv2_b": 0.1 * jax.random.normal(ks[6], (num_classes,), jnp.float32),
    }


if __name__ == "__main__":
    key = jax.random.PRNGKey(0)
    k_x, k_p = jax.random.split(key)

    N, Cin, H, W = 2, 4, 16, 16
    Cmid, NCLS = 32, 8

    x = jax.random.normal(k_x, (N, Cin, H, W), jnp.float32)
    params = init_params(k_p, Cin, Cmid, NCLS)

    out = jax.jit(ctx_aux_head_forward)(x, params)
    out = jax.block_until_ready(out)

    ref = ctx_aux_head_reference(x, params)
    assert out.shape == (N, NCLS, H, W), out.shape
    # bf16 MXU inputs with f32 accumulation -> loosened tolerance vs f32 ref.
    if not jnp.allclose(out, ref, rtol=5e-2, atol=5e-2):
        err = jnp.max(jnp.abs(out - ref))
        raise AssertionError(
            f"Pallas kernel output mismatch vs reference (max err {err})")

    print("KERNEL_OK")
</pallas_src>

<mosaic_0001>
module attributes {stable_mosaic.version = 11 : i64} {
  func.func @kernel(%arg0: i32, %arg1: i32, %arg2: memref<1x1x4x512xbf16, #tpu.memory_space<vmem>>, %arg3: memref<3x3x32x4xbf16, #tpu.memory_space<vmem>>, %arg4: memref<32x1xf32, #tpu.memory_space<vmem>>, %arg5: memref<8x32xbf16, #tpu.memory_space<vmem>>, %arg6: memref<8x1xf32, #tpu.memory_space<vmem>>, %arg7: memref<1x1x8x384xf32, #tpu.memory_space<vmem>>) attributes {dimension_semantics = [#tpu.dimension_semantics<parallel>, #tpu.dimension_semantics<parallel>], iteration_bounds = array<i64: 2, 1>, scalar_prefetch = 0 : i64, scratch_operands = 0 : i64, tpu.core_type = #tpu.core_type<tc>, window_params = [{transform_indices = @transform_0, window_bounds = array<i64: 1, 1, 4, 512>}, {pipeline_mode = #tpu.pipeline_mode<synchronous>, transform_indices = @transform_1, window_bounds = array<i64: 3, 3, 32, 4>}, {pipeline_mode = #tpu.pipeline_mode<synchronous>, transform_indices = @transform_2, window_bounds = array<i64: 32, 1>}, {pipeline_mode = #tpu.pipeline_mode<synchronous>, transform_indices = @transform_3, window_bounds = array<i64: 8, 32>}, {pipeline_mode = #tpu.pipeline_mode<synchronous>, transform_indices = @transform_4, window_bounds = array<i64: 8, 1>}, {transform_indices = @transform_5, window_bounds = array<i64: 1, 1, 8, 384>}]} {
    %cst = arith.constant 0.000000e+00 : f32
    %0 = vector.broadcast %cst : f32 to vector<32x384xf32>
    %c0 = arith.constant 0 : index
    %c0_0 = arith.constant 0 : index
    %c0_1 = arith.constant 0 : index
    %c0_2 = arith.constant 0 : index
    %1 = vector.load %arg2[%c0, %c0_0, %c0_1, %c0_2] : memref<1x1x4x512xbf16, #tpu.memory_space<vmem>>, vector<1x1x4x384xbf16>
    %2 = vector.shape_cast %1 : vector<1x1x4x384xbf16> to vector<4x384xbf16>
    %c0_3 = arith.constant 0 : index
    %c0_4 = arith.constant 0 : index
    %c0_5 = arith.constant 0 : index
    %c0_6 = arith.constant 0 : index
    %3 = vector.load %arg3[%c0_3, %c0_4, %c0_5, %c0_6] : memref<3x3x32x4xbf16, #tpu.memory_space<vmem>>, vector<1x1x32x4xbf16>
    %4 = vector.shape_cast %3 : vector<1x1x32x4xbf16> to vector<32x4xbf16>
    %cst_7 = arith.constant dense<0.000000e+00> : vector<32x384xf32>
    %5 = tpu.matmul %4, %2, %cst_7 {dimension_numbers = #tpu.dot_dimension_numbers<[1], [0], [0], [1], [0, 0, 1, 1], [], []>} : vector<32x4xbf16>, vector<4x384xbf16>, vector<32x384xf32> -> vector<32x384xf32>
    %6 = arith.addf %0, %5 : vector<32x384xf32>
    %c0_8 = arith.constant 0 : index
    %c0_9 = arith.constant 0 : index
    %c0_10 = arith.constant 0 : index
    %c1 = arith.constant 1 : index
    %7 = vector.load %arg2[%c0_8, %c0_9, %c0_10, %c1] : memref<1x1x4x512xbf16, #tpu.memory_space<vmem>>, vector<1x1x4x384xbf16>
    %8 = vector.shape_cast %7 : vector<1x1x4x384xbf16> to vector<4x384xbf16>
    %c0_11 = arith.constant 0 : index
    %c1_12 = arith.constant 1 : index
    %c0_13 = arith.constant 0 : index
    %c0_14 = arith.constant 0 : index
    %9 = vector.load %arg3[%c0_11, %c1_12, %c0_13, %c0_14] : memref<3x3x32x4xbf16, #tpu.memory_space<vmem>>, vector<1x1x32x4xbf16>
    %10 = vector.shape_cast %9 : vector<1x1x32x4xbf16> to vector<32x4xbf16>
    %cst_15 = arith.constant dense<0.000000e+00> : vector<32x384xf32>
    %11 = tpu.matmul %10, %8, %cst_15 {dimension_numbers = #tpu.dot_dimension_numbers<[1], [0], [0], [1], [0, 0, 1, 1], [], []>} : vector<32x4xbf16>, vector<4x384xbf16>, vector<32x384xf32> -> vector<32x384xf32>
    %12 = arith.addf %6, %11 : vector<32x384xf32>
    %c0_16 = arith.constant 0 : index
    %c0_17 = arith.constant 0 : index
    %c0_18 = arith.constant 0 : index
    %c2 = arith.constant 2 : index
    %13 = vector.load %arg2[%c0_16, %c0_17, %c0_18, %c2] : memref<1x1x4x512xbf16, #tpu.memory_space<vmem>>, vector<1x1x4x384xbf16>
    %14 = vector.shape_cast %13 : vector<1x1x4x384xbf16> to vector<4x384xbf16>
    %c0_19 = arith.constant 0 : index
    %c2_20 = arith.constant 2 : index
    %c0_21 = arith.constant 0 : index
    %c0_22 = arith.constant 0 : index
    %15 = vector.load %arg3[%c0_19, %c2_20, %c0_21, %c0_22] : memref<3x3x32x4xbf16, #tpu.memory_space<vmem>>, vector<1x1x32x4xbf16>
    %16 = vector.shape_cast %15 : vector<1x1x32x4xbf16> to vector<32x4xbf16>
    %cst_23 = arith.constant dense<0.000000e+00> : vector<32x384xf32>
    %17 = tpu.matmul %16, %14, %cst_23 {dimension_numbers = #tpu.dot_dimension_numbers<[1], [0], [0], [1], [0, 0, 1, 1], [], []>} : vector<32x4xbf16>, vector<4x384xbf16>, vector<32x384xf32> -> vector<32x384xf32>
    %18 = arith.addf %12, %17 : vector<32x384xf32>
    %c0_24 = arith.constant 0 : index
    %c0_25 = arith.constant 0 : index
    %c0_26 = arith.constant 0 : index
    %c18 = arith.constant 18 : index
    %19 = vector.load %arg2[%c0_24, %c0_25, %c0_26, %c18] : memref<1x1x4x512xbf16, #tpu.memory_space<vmem>>, vector<1x1x4x384xbf16>
    %20 = vector.shape_cast %19 : vector<1x1x4x384xbf16> to vector<4x384xbf16>
    %c1_27 = arith.constant 1 : index
    %c0_28 = arith.constant 0 : index
    %c0_29 = arith.constant 0 : index
    %c0_30 = arith.constant 0 : index
    %21 = vector.load %arg3[%c1_27, %c0_28, %c0_29, %c0_30] : memref<3x3x32x4xbf16, #tpu.memory_space<vmem>>, vector<1x1x32x4xbf16>
    %22 = vector.shape_cast %21 : vector<1x1x32x4xbf16> to vector<32x4xbf16>
    %cst_31 = arith.constant dense<0.000000e+00> : vector<32x384xf32>
    %23 = tpu.matmul %22, %20, %cst_31 {dimension_numbers = #tpu.dot_dimension_numbers<[1], [0], [0], [1], [0, 0, 1, 1], [], []>} : vector<32x4xbf16>, vector<4x384xbf16>, vector<32x384xf32> -> vector<32x384xf32>
    %24 = arith.addf %18, %23 : vector<32x384xf32>
    %c0_32 = arith.constant 0 : index
    %c0_33 = arith.constant 0 : index
    %c0_34 = arith.constant 0 : index
    %c19 = arith.constant 19 : index
    %25 = vector.load %arg2[%c0_32, %c0_33, %c0_34, %c19] : memref<1x1x4x512xbf16, #tpu.memory_space<vmem>>, vector<1x1x4x384xbf16>
    %26 = vector.shape_cast %25 : vector<1x1x4x384xbf16> to vector<4x384xbf16>
    %c1_35 = arith.constant 1 : index
    %c1_36 = arith.constant 1 : index
    %c0_37 = arith.constant 0 : index
    %c0_38 = arith.constant 0 : index
    %27 = vector.load %arg3[%c1_35, %c1_36, %c0_37, %c0_38] : memref<3x3x32x4xbf16, #tpu.memory_space<vmem>>, vector<1x1x32x4xbf16>
    %28 = vector.shape_cast %27 : vector<1x1x32x4xbf16> to vector<32x4xbf16>
    %cst_39 = arith.constant dense<0.000000e+00> : vector<32x384xf32>
    %29 = tpu.matmul %28, %26, %cst_39 {dimension_numbers = #tpu.dot_dimension_numbers<[1], [0], [0], [1], [0, 0, 1, 1], [], []>} : vector<32x4xbf16>, vector<4x384xbf16>, vector<32x384xf32> -> vector<32x384xf32>
    %30 = arith.addf %24, %29 : vector<32x384xf32>
    %c0_40 = arith.constant 0 : index
    %c0_41 = arith.constant 0 : index
    %c0_42 = arith.constant 0 : index
    %c20 = arith.constant 20 : index
    %31 = vector.load %arg2[%c0_40, %c0_41, %c0_42, %c20] : memref<1x1x4x512xbf16, #tpu.memory_space<vmem>>, vector<1x1x4x384xbf16>
    %32 = vector.shape_cast %31 : vector<1x1x4x384xbf16> to vector<4x384xbf16>
    %c1_43 = arith.constant 1 : index
    %c2_44 = arith.constant 2 : index
    %c0_45 = arith.constant 0 : index
    %c0_46 = arith.constant 0 : index
    %33 = vector.load %arg3[%c1_43, %c2_44, %c0_45, %c0_46] : memref<3x3x32x4xbf16, #tpu.memory_space<vmem>>, vector<1x1x32x4xbf16>
    %34 = vector.shape_cast %33 : vector<1x1x32x4xbf16> to vector<32x4xbf16>
    %cst_47 = arith.constant dense<0.000000e+00> : vector<32x384xf32>
    %35 = tpu.matmul %34, %32, %cst_47 {dimension_numbers = #tpu.dot_dimension_numbers<[1], [0], [0], [1], [0, 0, 1, 1], [], []>} : vector<32x4xbf16>, vector<4x384xbf16>, vector<32x384xf32> -> vector<32x384xf32>
    %36 = arith.addf %30, %35 : vector<32x384xf32>
    %c0_48 = arith.constant 0 : index
    %c0_49 = arith.constant 0 : index
    %c0_50 = arith.constant 0 : index
    %c36 = arith.constant 36 : index
    %37 = vector.load %arg2[%c0_48, %c0_49, %c0_50, %c36] : memref<1x1x4x512xbf16, #tpu.memory_space<vmem>>, vector<1x1x4x384xbf16>
    %38 = vector.shape_cast %37 : vector<1x1x4x384xbf16> to vector<4x384xbf16>
    %c2_51 = arith.constant 2 : index
    %c0_52 = arith.constant 0 : index
    %c0_53 = arith.constant 0 : index
    %c0_54 = arith.constant 0 : index
    %39 = vector.load %arg3[%c2_51, %c0_52, %c0_53, %c0_54] : memref<3x3x32x4xbf16, #tpu.memory_space<vmem>>, vector<1x1x32x4xbf16>
    %40 = vector.shape_cast %39 : vector<1x1x32x4xbf16> to vector<32x4xbf16>
    %cst_55 = arith.constant dense<0.000000e+00> : vector<32x384xf32>
    %41 = tpu.matmul %40, %38, %cst_55 {dimension_numbers = #tpu.dot_dimension_numbers<[1], [0], [0], [1], [0, 0, 1, 1], [], []>} : vector<32x4xbf16>, vector<4x384xbf16>, vector<32x384xf32> -> vector<32x384xf32>
    %42 = arith.addf %36, %41 : vector<32x384xf32>
    %c0_56 = arith.constant 0 : index
    %c0_57 = arith.constant 0 : index
    %c0_58 = arith.constant 0 : index
    %c37 = arith.constant 37 : index
    %43 = vector.load %arg2[%c0_56, %c0_57, %c0_58, %c37] : memref<1x1x4x512xbf16, #tpu.memory_space<vmem>>, vector<1x1x4x384xbf16>
    %44 = vector.shape_cast %43 : vector<1x1x4x384xbf16> to vector<4x384xbf16>
    %c2_59 = arith.constant 2 : index
    %c1_60 = arith.constant 1 : index
    %c0_61 = arith.constant 0 : index
    %c0_62 = arith.constant 0 : index
    %45 = vector.load %arg3[%c2_59, %c1_60, %c0_61, %c0_62] : memref<3x3x32x4xbf16, #tpu.memory_space<vmem>>, vector<1x1x32x4xbf16>
    %46 = vector.shape_cast %45 : vector<1x1x32x4xbf16> to vector<32x4xbf16>
    %cst_63 = arith.constant dense<0.000000e+00> : vector<32x384xf32>
    %47 = tpu.matmul %46, %44, %cst_63 {dimension_numbers = #tpu.dot_dimension_numbers<[1], [0], [0], [1], [0, 0, 1, 1], [], []>} : vector<32x4xbf16>, vector<4x384xbf16>, vector<32x384xf32> -> vector<32x384xf32>
    %48 = arith.addf %42, %47 : vector<32x384xf32>
    %c0_64 = arith.constant 0 : index
    %c0_65 = arith.constant 0 : index
    %c0_66 = arith.constant 0 : index
    %c38 = arith.constant 38 : index
    %49 = vector.load %arg2[%c0_64, %c0_65, %c0_66, %c38] : memref<1x1x4x512xbf16, #tpu.memory_space<vmem>>, vector<1x1x4x384xbf16>
    %50 = vector.shape_cast %49 : vector<1x1x4x384xbf16> to vector<4x384xbf16>
    %c2_67 = arith.constant 2 : index
    %c2_68 = arith.constant 2 : index
    %c0_69 = arith.constant 0 : index
    %c0_70 = arith.constant 0 : index
    %51 = vector.load %arg3[%c2_67, %c2_68, %c0_69, %c0_70] : memref<3x3x32x4xbf16, #tpu.memory_space<vmem>>, vector<1x1x32x4xbf16>
    %52 = vector.shape_cast %51 : vector<1x1x32x4xbf16> to vector<32x4xbf16>
    %cst_71 = arith.constant dense<0.000000e+00> : vector<32x384xf32>
    %53 = tpu.matmul %52, %50, %cst_71 {dimension_numbers = #tpu.dot_dimension_numbers<[1], [0], [0], [1], [0, 0, 1, 1], [], []>} : vector<32x4xbf16>, vector<4x384xbf16>, vector<32x384xf32> -> vector<32x384xf32>
    %54 = arith.addf %48, %53 : vector<32x384xf32>
    %c0_72 = arith.constant 0 : index
    %c0_73 = arith.constant 0 : index
    %55 = vector.load %arg4[%c0_72, %c0_73] : memref<32x1xf32, #tpu.memory_space<vmem>>, vector<32x1xf32>
    %56 = vector.broadcast %55 : vector<32x1xf32> to vector<32x384xf32>
    %57 = arith.addf %54, %56 : vector<32x384xf32>
    %cst_74 = arith.constant 0.000000e+00 : f32
    %58 = vector.broadcast %cst_74 : f32 to vector<32x384xf32>
    %59 = arith.maximumf %57, %58 : vector<32x384xf32>
    %c0_75 = arith.constant 0 : index
    %c0_76 = arith.constant 0 : index
    %60 = vector.load %arg5[%c0_75, %c0_76] : memref<8x32xbf16, #tpu.memory_space<vmem>>, vector<8x32xbf16>
    %61 = arith.truncf %59 : vector<32x384xf32> to vector<32x384xbf16>
    %cst_77 = arith.constant dense<0.000000e+00> : vector<8x384xf32>
    %62 = tpu.matmul %60, %61, %cst_77 {dimension_numbers = #tpu.dot_dimension_numbers<[1], [0], [0], [1], [0, 0, 1, 1], [], []>} : vector<8x32xbf16>, vector<32x384xbf16>, vector<8x384xf32> -> vector<8x384xf32>
    %c0_78 = arith.constant 0 : index
    %c0_79 = arith.constant 0 : index
    %63 = vector.load %arg6[%c0_78, %c0_79] : memref<8x1xf32, #tpu.memory_space<vmem>>, vector<8x1xf32>
    %64 = vector.broadcast %63 : vector<8x1xf32> to vector<8x384xf32>
    %65 = arith.addf %62, %64 : vector<8x384xf32>
    %c0_80 = arith.constant 0 : index
    %c0_81 = arith.constant 0 : index
    %c0_82 = arith.constant 0 : index
    %c0_83 = arith.constant 0 : index
    %66 = vector.load %arg7[%c0_80, %c0_81, %c0_82, %c0_83] : memref<1x1x8x384xf32, #tpu.memory_space<vmem>>, vector<1x1x8x384xf32>
    %67 = vector.shape_cast %66 : vector<1x1x8x384xf32> to vector<8x384xf32>
    %68 = vector.shape_cast %65 : vector<8x384xf32> to vector<1x1x8x384xf32>
    tpu.vector_store %arg7[%c0_80, %c0_81, %c0_82, %c0_83], %68 {strides = array<i32>} : memref<1x1x8x384xf32, #tpu.memory_space<vmem>>, vector<1x1x8x384xf32>,
    return
  }
  func.func @transform_0(%arg0: i32, %arg1: i32) -> (i32, i32, i32, i32) {
    %c0_i32 = arith.constant 0 : i32
    %c0_i32_0 = arith.constant 0 : i32
    %c0_i32_1 = arith.constant 0 : i32
    return %arg0, %arg1, %c0_i32, %c0_i32_0 : i32, i32, i32, i32
  }
  func.func @transform_1(%arg0: i32, %arg1: i32) -> (i32, i32, i32, i32) {
    %c0_i32 = arith.constant 0 : i32
    %c0_i32_0 = arith.constant 0 : i32
    %c0_i32_1 = arith.constant 0 : i32
    %c0_i32_2 = arith.constant 0 : i32
    %c0_i32_3 = arith.constant 0 : i32
    return %c0_i32, %c0_i32_0, %c0_i32_1, %c0_i32_2 : i32, i32, i32, i32
  }
  func.func @transform_2(%arg0: i32, %arg1: i32) -> (i32, i32) {
    %c0_i32 = arith.constant 0 : i32
    %c0_i32_0 = arith.constant 0 : i32
    %c0_i32_1 = arith.constant 0 : i32
    return %c0_i32, %c0_i32_0 : i32, i32
  }
  func.func @transform_3(%arg0: i32, %arg1: i32) -> (i32, i32) {
    %c0_i32 = arith.constant 0 : i32
    %c0_i32_0 = arith.constant 0 : i32
    %c0_i32_1 = arith.constant 0 : i32
    return %c0_i32, %c0_i32_0 : i32, i32
  }
  func.func @transform_4(%arg0: i32, %arg1: i32) -> (i32, i32) {
    %c0_i32 = arith.constant 0 : i32
    %c0_i32_0 = arith.constant 0 : i32
    %c0_i32_1 = arith.constant 0 : i32
    return %c0_i32, %c0_i32_0 : i32, i32
  }
  func.func @transform_5(%arg0: i32, %arg1: i32) -> (i32, i32, i32, i32) {
    %c0_i32 = arith.constant 0 : i32
    %c0_i32_0 = arith.constant 0 : i32
    %c0_i32_1 = arith.constant 0 : i32
    return %arg0, %arg1, %c0_i32, %c0_i32_0 : i32, i32, i32, i32
  }
}

</mosaic_0001>

<llo_original>
// kernel: ctx_aux_head_forward.1
$region0: #{ctx_aux_head_forward.1}
  #allocation0 [shape = 'u32[]', space=smem, size = 0x4, offset = 0x4, fixed_abs, tag = 'smem constant byte address 0x4 - core index']
  #allocation1 [shape = 'u32[144,128]{1,0:T(1,128)}', space=vmem, size = 0x12000, scoped, tag = 'internal scratch']
  %s0 = inlined_call_operand.vmem [shape: bf16[2,1,4,512], index: 0, kind: input, shape index: {}]
  %s1 = inlined_call_operand.vmem [shape: bf16[3,3,32,4], index: 1, kind: input, shape index: {}]
  %s2 = inlined_call_operand.vmem [shape: f32[32,1], index: 2, kind: input, shape index: {}]
  %s3 = inlined_call_operand.vmem [shape: bf16[8,32], index: 3, kind: input, shape index: {}]
  %s4 = inlined_call_operand.vmem [shape: f32[8,1], index: 4, kind: input, shape index: {}]
  %s5 = inlined_call_operand.vmem [shape: f32[2,1,8,384], index: 5, kind: output, shape index: {}]
  %s6 = sld [smem:[#allocation0]]
  $region53: #{ctx_aux_head_forward.1} parent=0
    _
  %s8 = ssub.s32 1, %s6
  %s9 = scalar_select 0, %s8, %s6
  loop: start=0, step=1, limit=4
  $region2: #{ctx_aux_head_forward.1} parent=0 // loop_pre_header
    _
  $region3: #{ctx_aux_head_forward.1} parent=0 // loop_header
    %s11 = sphi 0, %s15
    %p12 = scmp.ge.s32.totalorder %s11, 4
    %s18 = sphi 0, %s30
    %s19 = sphi 0, %s26
    %s20 = sphi 0, %s18
    %s21 = sphi 0, %s19
    %s22 = sphi 0, %s20
    %s23 = sphi 0, %s21
    %s35 = sphi 0, %s37
    %s38 = sphi 0, %s35
    %s39 = sphi 0, %s38
    %s55 = sphi 0, %s39
    %s59 = sphi 0, %s59
    %s61 = sphi 0, %s59
    %s62 = sphi 0, %s61
    %s76 = sphi 0, %s62
    %s80 = sphi 0, %s80
    %s82 = sphi 0, %s80
    %s83 = sphi 0, %s82
    %s97 = sphi 0, %s83
    %s101 = sphi 0, %s101
    %s103 = sphi 0, %s101
    %s104 = sphi 0, %s103
    %s118 = sphi 0, %s104
    %s122 = sphi 0, %s122
    %s124 = sphi 0, %s122
    %s125 = sphi 0, %s124
    %s139 = sphi 0, %s125
    %s147 = sphi 0, %s149
    %s150 = sphi 0, %s147
    %s151 = sphi 0, %s150
    %s167 = sphi 0, %s151
  $region4: #{ctx_aux_head_forward.1} parent=0 // loop_header_branch
    %14 = sbr.rel (%p12) target = $region8
  $region5: #{ctx_aux_head_forward.1} parent=0 // loop_body
    %s16 = ssub.s32 %s11, 1
    %s17 = ssub.s32 %s11, 2
    %s24 = sadd.s32 1, %s19
    %p25 = scmp.ge.s32.totalorder %s24, 1
    %s26 = scalar_select %p25, 0, %s24
    %s27 = sadd.s32 1, %s18
    %s28 = scalar_select %p25, %s27, %s18
    %p29 = scmp.ge.s32.totalorder %s28, 2
    %s30 = scalar_select %p29, 0, %s28
    %s31 = ssub.s32 %s18, %s30
    %s32 = ssub.s32 %s19, %s26
    %s33 = sor.u32 %s31, %s32
    %p34 = scmp.eq.s32.totalorder %s33, 0
    %s36 = sadd.s32 %s35, 1
    %s37 = scalar_select %p34, %s35, %s36
    %p40 = pneg %p34
    %p41 = scmp.eq.s32.totalorder %s11, 1
    %p42 = por %p40, %p41
    %p43 = scmp.ne.s32.totalorder %s35, %s38
    %p44 = scmp.eq.s32.totalorder %s11, 0
    %p45 = por %p43, %p44
    %p46 = scmp.ne.s32.totalorder %s35, %s38
    %p47 = scmp.eq.s32.totalorder %s16, 1
    %p48 = por %p46, %p47
    %p49 = scmp.ne.s32.totalorder %s38, %s39
    %p50 = scmp.eq.s32.totalorder %s16, 0
    %p51 = por %p49, %p50
    %p52 = scmp.ne.s32.totalorder %s38, %s39
    %p53 = scmp.eq.s32.totalorder %s17, 1
    %p54 = por %p52, %p53
    %p56 = scmp.ne.s32.totalorder %s39, %s55
    %p57 = scmp.eq.s32.totalorder %s17, 0
    %p58 = por %p56, %p57
    %s60 = sadd.s32 %s59, 1
    %p63 = scmp.eq.s32.totalorder %s11, 1
    %p64 = scmp.ne.s32.totalorder %s59, %s61
    %p65 = scmp.eq.s32.totalorder %s11, 0
    %p66 = por %p64, %p65
    %p67 = scmp.ne.s32.totalorder %s59, %s61
    %p68 = scmp.eq.s32.totalorder %s16, 1
    %p69 = por %p67, %p68
    %p70 = scmp.ne.s32.totalorder %s61, %s62
    %p71 = scmp.eq.s32.totalorder %s16, 0
    %p72 = por %p70, %p71
    %p73 = scmp.ne.s32.totalorder %s61, %s62
    %p74 = scmp.eq.s32.totalorder %s17, 1
    %p75 = por %p73, %p74
    %p77 = scmp.ne.s32.totalorder %s62, %s76
    %p78 = scmp.eq.s32.totalorder %s17, 0
    %p79 = por %p77, %p78
    %s81 = sadd.s32 %s80, 1
    %p84 = scmp.eq.s32.totalorder %s11, 1
    %p85 = scmp.ne.s32.totalorder %s80, %s82
    %p86 = scmp.eq.s32.totalorder %s11, 0
    %p87 = por %p85, %p86
    %p88 = scmp.ne.s32.totalorder %s80, %s82
    %p89 = scmp.eq.s32.totalorder %s16, 1
    %p90 = por %p88, %p89
    %p91 = scmp.ne.s32.totalorder %s82, %s83
    %p92 = scmp.eq.s32.totalorder %s16, 0
    %p93 = por %p91, %p92
    %p94 = scmp.ne.s32.totalorder %s82, %s83
    %p95 = scmp.eq.s32.totalorder %s17, 1
    %p96 = por %p94, %p95
    %p98 = scmp.ne.s32.totalorder %s83, %s97
    %p99 = scmp.eq.s32.totalorder %s17, 0
    %p100 = por %p98, %p99
    %s102 = sadd.s32 %s101, 1
    %p105 = scmp.eq.s32.totalorder %s11, 1
    %p106 = scmp.ne.s32.totalorder %s101, %s103
    %p107 = scmp.eq.s32.totalorder %s11, 0
    %p108 = por %p106, %p107
    %p109 = scmp.ne.s32.totalorder %s101, %s103
    %p110 = scmp.eq.s32.totalorder %s16, 1
    %p111 = por %p109, %p110
    %p112 = scmp.ne.s32.totalorder %s103, %s104
    %p113 = scmp.eq.s32.totalorder %s16, 0
    %p114 = por %p112, %p113
    %p115 = scmp.ne.s32.totalorder %s103, %s104
    %p116 = scmp.eq.s32.totalorder %s17, 1
    %p117 = por %p115, %p116
    %p119 = scmp.ne.s32.totalorder %s104, %s118
    %p120 = scmp.eq.s32.totalorder %s17, 0
    %p121 = por %p119, %p120
    %s123 = sadd.s32 %s122, 1
    %p126 = scmp.eq.s32.totalorder %s11, 1
    %p127 = scmp.ne.s32.totalorder %s122, %s124
    %p128 = scmp.eq.s32.totalorder %s11, 0
    %p129 = por %p127, %p128
    %p130 = scmp.ne.s32.totalorder %s122, %s124
    %p131 = scmp.eq.s32.totalorder %s16, 1
    %p132 = por %p130, %p131
    %p133 = scmp.ne.s32.totalorder %s124, %s125
    %p134 = scmp.eq.s32.totalorder %s16, 0
    %p135 = por %p133, %p134
    %p136 = scmp.ne.s32.totalorder %s124, %s125
    %p137 = scmp.eq.s32.totalorder %s17, 1
    %p138 = por %p136, %p137
    %p140 = scmp.ne.s32.totalorder %s125, %s139
    %p141 = scmp.eq.s32.totalorder %s17, 0
    %p142 = por %p140, %p141
    %s143 = ssub.s32 %s18, %s30
    %s144 = ssub.s32 %s19, %s26
    %s145 = sor.u32 %s143, %s144
    %p146 = scmp.eq.s32.totalorder %s145, 0
    %s148 = sadd.s32 %s147, 1
    %s149 = scalar_select %p146, %s147, %s148
    %p152 = pneg %p146
    %p153 = scmp.eq.s32.totalorder %s11, 1
    %p154 = por %p152, %p153
    %p155 = scmp.ne.s32.totalorder %s147, %s150
    %p156 = scmp.eq.s32.totalorder %s11, 0
    %p157 = por %p155, %p156
    %p158 = scmp.ne.s32.totalorder %s147, %s150
    %p159 = scmp.eq.s32.totalorder %s16, 1
    %p160 = por %p158, %p159
    %p161 = scmp.ne.s32.totalorder %s150, %s151
    %p162 = scmp.eq.s32.totalorder %s16, 0
    %p163 = por %p161, %p162
    %p164 = scmp.ne.s32.totalorder %s150, %s151
    %p165 = scmp.eq.s32.totalorder %s17, 1
    %p166 = por %p164, %p165
    %p168 = scmp.ne.s32.totalorder %s151, %s167
    %p169 = scmp.eq.s32.totalorder %s17, 0
    %p170 = por %p168, %p169
    %p171 = scmp.le.s32.totalorder 1, %s11
    %p172 = scmp.lt.s32.totalorder %s11, 3
    %p173 = pnand %p171, %p172
    %p174 = pneg %p173
    // Predicated region
    $region9: #{ctx_aux_head_forward.1} parent=5 // pred_check
      _
    $region10: #{ctx_aux_head_forward.1} parent=5 // pred_check_branch
      %176 = sbr.rel (%p173) target = $region12
    $region11: #{ctx_aux_head_forward.1} parent=5 // pred_region
      %s177 = ssub.s32 %s11, 1
      // Predicated region
      $region13: #{ctx_aux_head_forward.1} parent=11 // pred_check
        %p178 = pneg %p72
      $region14: #{ctx_aux_head_forward.1} parent=11 // pred_check_branch
        %180 = sbr.rel (%p178) target = $region16
      $region15: #{ctx_aux_head_forward.1} parent=11 // pred_region
        _
      $region16: #{ctx_aux_head_forward.1} parent=11 // pred_fallthru
        _
      // Predicated region
      $region17: #{ctx_aux_head_forward.1} parent=11 // pred_check
        %p181 = pneg %p93
      $region18: #{ctx_aux_head_forward.1} parent=11 // pred_check_branch
        %183 = sbr.rel (%p181) target = $region20
      $region19: #{ctx_aux_head_forward.1} parent=11 // pred_region
        _
      $region20: #{ctx_aux_head_forward.1} parent=11 // pred_fallthru
        _
      // Predicated region
      $region21: #{ctx_aux_head_forward.1} parent=11 // pred_check
        %p184 = pneg %p114
      $region22: #{ctx_aux_head_forward.1} parent=11 // pred_check_branch
        %186 = sbr.rel (%p184) target = $region24
      $region23: #{ctx_aux_head_forward.1} parent=11 // pred_region
        _
      $region24: #{ctx_aux_head_forward.1} parent=11 // pred_fallthru
        _
      // Predicated region
      $region25: #{ctx_aux_head_forward.1} parent=11 // pred_check
        %p187 = pneg %p135
      $region26: #{ctx_aux_head_forward.1} parent=11 // pred_check_branch
        %189 = sbr.rel (%p187) target = $region28
      $region27: #{ctx_aux_head_forward.1} parent=11 // pred_region
        _
      $region28: #{ctx_aux_head_forward.1} parent=11 // pred_fallthru
        _
    $region12: #{ctx_aux_head_forward.1} parent=5 // pred_fallthru
      _
    %p190 = scmp.lt.s32.totalorder %s11, 2
    // Predicated region
    $region29: #{ctx_aux_head_forward.1} parent=5 // pred_check
      %p191 = pneg %p190
    $region30: #{ctx_aux_head_forward.1} parent=5 // pred_check_branch
      %193 = sbr.rel (%p191) target = $region32
    $region31: #{ctx_aux_head_forward.1} parent=5 // pred_region
      // Predicated region
      $region33: #{ctx_aux_head_forward.1} parent=31 // pred_check
        %p194 = pneg %p45
      $region34: #{ctx_aux_head_forward.1} parent=31 // pred_check_branch
        %196 = sbr.rel (%p194) target = $region36
      $region35: #{ctx_aux_head_forward.1} parent=31 // pred_region
        %p197 = scmp.lt.s32.totalorder %s18, 1
        %s198 = scalar_select %p197, %s18, 1
        %p199 = scmp.lt.s32.totalorder %s19, 0
        %s200 = scalar_select %p199, %s19, 0
        %s201 = smul.addr %s200, 4
        %s202 = smul.addr %s198, 4
        %s203 = sadd.s32 %s201, %s202
        %s204 = smul.addr %s203, 2
        %s205 = scalar_lea.vmem %s0, %s204
      $region36: #{ctx_aux_head_forward.1} parent=31 // pred_fallthru
        _
    $region32: #{ctx_aux_head_forward.1} parent=5 // pred_fallthru
      _
    %p206 = scmp.le.s32.totalorder 1, %s11
    %p207 = scmp.lt.s32.totalorder %s11, 3
    %p208 = pnand %p206, %p207
    %p209 = pneg %p208
    // Predicated region
    $region37: #{ctx_aux_head_forward.1} parent=5 // pred_check
      _
    $region38: #{ctx_aux_head_forward.1} parent=5 // pred_check_branch
      %211 = sbr.rel (%p208) target = $region40
    $region39: #{ctx_aux_head_forward.1} parent=5 // pred_region
      %s212 = ssub.s32 %s11, 1
      %p213 = scmp.lt.s32.totalorder %s20, 1
      %s214 = scalar_select %p213, %s20, 1
      %p215 = scmp.lt.s32.totalorder %s21, 0
      %s216 = scalar_select %p215, %s21, 0
      %s217 = smul.addr %s216, 4
      %s218 = smul.addr %s214, 4
      %s219 = sadd.s32 %s217, %s218
      %s220 = smul.addr %s219, 2
      %s221 = scalar_lea.vmem %s0, %s220
      %p222 = pneg %p51
      %p223 = pneg %p48
      %p224 = pneg %p72
      %p225 = pneg %p69
      %p226 = pneg %p93
      %p227 = pneg %p90
      %p228 = pneg %p114
      %p229 = pneg %p111
      %p230 = pneg %p135
      %p231 = pneg %p132
      %p232 = pneg %p163
      %p233 = pneg %p160
      %p234 = scmp.lt.s32.totalorder %s20, 1
      %s235 = scalar_select %p234, %s20, 1
      %p236 = scmp.lt.s32.totalorder %s21, 0
      %s237 = scalar_select %p236, %s21, 0
      %s238 = smul.addr %s237, 3
      %s239 = smul.addr %s235, 3
      %s240 = sadd.s32 %s238, %s239
      %s241 = smul.addr %s240, 8
      %s242 = scalar_lea.vmem %s5, %s241
      %p243 = scmp.lt.s32.totalorder %s20, 1
      %s244 = scalar_select %p243, %s20, 1
      %p245 = scmp.lt.s32.totalorder %s21, 0
      %s246 = scalar_select %p245, %s21, 0
      %s247 = smul.addr %s246, 4
      %s248 = smul.addr %s244, 4
      %s249 = sadd.s32 %s247, %s248
      %s250 = smul.addr %s249, 2
      %s251 = scalar_lea.vmem %s0, %s250
      %p252 = scmp.lt.s32.totalorder %s20, 1
      %s253 = scalar_select %p252, %s20, 1
      %p254 = scmp.lt.s32.totalorder %s21, 0
      %s255 = scalar_select %p254, %s21, 0
      %s256 = smul.addr %s255, 3
      %s257 = smul.addr %s253, 3
      %s258 = sadd.s32 %s256, %s257
      %s259 = smul.addr %s258, 8
      %s260 = scalar_lea.vmem %s5, %s259
      %v262 = vld [vmem:[%s251] sm:$0x3f]
      %v263 = vld [vmem:[%s1] sm:$0xf]
      %v264 = vld [vmem:[%s1 + $0x4] sm:$0xf]
      %v265 = vld [vmem:[%s1 + $0x8] sm:$0xf]
      %v266 = vld [vmem:[%s1 + $0xc] sm:$0xf]
      %v267 = vld [vmem:[%s251] sm:$0xff]
      %s268 = scalar_lea.vmem %s1, 16
      %v269 = vld [vmem:[%s268] sm:$0xf]
      %v270 = vld [vmem:[%s268 + $0x4] sm:$0xf]
      %v271 = vld [vmem:[%s268 + $0x8] sm:$0xf]
      %v272 = vld [vmem:[%s268 + $0xc] sm:$0xf]
      %v277 = vunpack.c.l.b16 %v269
      %v278 = vunpack.c.l.b16 %v270
      %v279 = vunpack.c.l.b16 %v271
      %v280 = vunpack.c.l.b16 %v272
      %v281 = vpack.c.b16 %v278, %v277
      %v282 = vpack.c.b16 %v280, %v279
      %v284 = vcombine.high %v267, %v267
      %v286 = vunpack.c.l.s4 1983009808
      %v287 = vunpack.c.0.s8 %v286
      %v288 = vlaneseq
      %v289 = vshrl.u32 %v288, 7
      %v290 = vsub.s32 %v287, %v289
      %v291 = vrot.slane %v267, %v290
      %v293 = vunpack.c.l.s4 1983009808
      %v294 = vunpack.c.0.s8 %v293
      %v295 = vlaneseq
      %v296 = vshrl.u32 %v295, 7
      %v297 = vsub.s32 %v294, %v296
      %v298 = vrot.slane %v284, %v297
      %v299 = vcombine.high %v291, %v291
      %v300 = vcombine.high %v298, %v298
      %301 = vrot.lane.b32.xlu0 %v291, 127
      %v302 = vpop.permute.xlu0 %301
      %303 = vrot.lane.b32.xlu0 %v299, 127
      %v304 = vpop.permute.xlu0 %303
      %305 = vrot.lane.b32.xlu0 %v298, 127
      %v306 = vpop.permute.xlu0 %305
      %307 = vrot.lane.b32.xlu0 %v300, 127
      %v308 = vpop.permute.xlu0 %307
      %vm309 = vcmask 1039360
      %v310 = vsel %vm309, %v302, %v304
      %v311 = vsel %vm309, %v304, %v306
      %v312 = vsel %vm309, %v306, %v308
      %vm313 = vcmask 31744
      %v315 = vsel %vm313, %v281, 0
      %v318 = vsel %vm313, %v282, 0
      %vm320 = vcmask 1041408
      %v322 = vsel %vm320, %v310, 0
      %v325 = vsel %vm320, %v311, 0
      %v328 = vsel %vm320, %v312, 0
      %330 = vmatprep.subr.bf16.mxu0 %v325
      %331 = vmatpush1.bf16.msra.mxu0 %v322
      %332 = vmatprep.subr.bf16.mxu0 0
      %333 = vmatpush1.bf16.msra.mxu0 0
      %334 = vmatprep.subr.bf16.mxu0 0
      %335 = vmatpush1.bf16.msra.mxu0 0
      %336 = vmatprep.subr.bf16.mxu0 0
      %337 = vmatpush1.bf16.msra.mxu0 0
      %338 = vmatprep.subr.bf16.mxu0 0
      %339 = vmatpush1.bf16.msra.mxu0 0
      %340 = vmatprep.subr.bf16.mxu0 0
      %341 = vmatpush1.bf16.msra.mxu0 0
      %342 = vmatprep.subr.bf16.mxu0 0
      %343 = vmatpush1.bf16.msra.mxu0 0
      %344 = vmatprep.subr.bf16.mxu0 0
      %345 = vmatpush1.bf16.msra.mxu0 0
      %346 = vmatprep.subr.bf16.mxu0 0
      %347 = vmatpush1.bf16.msra.mxu0 0
      %348 = vmatprep.subr.bf16.mxu0 0
      %349 = vmatpush1.bf16.msra.mxu0 0
      %350 = vmatprep.subr.bf16.mxu0 0
      %351 = vmatpush1.bf16.msra.mxu0 0
      %352 = vmatprep.subr.bf16.mxu0 0
      %353 = vmatpush1.bf16.msra.mxu0 0
      %354 = vmatprep.subr.bf16.mxu0 0
      %355 = vmatpush1.bf16.msra.mxu0 0
      %356 = vmatprep.subr.bf16.mxu0 0
      %357 = vmatpush1.bf16.msra.mxu0 0
      %358 = vmatprep.subr.bf16.mxu0 0
      %359 = vmatpush1.bf16.msra.mxu0 0
      %360 = vmatprep.subr.bf16.mxu0 0
      %361 = vmatpush1.bf16.msra.mxu0 0
      %362 = vmatprep.mubr.bf16.mxu0 0
      %363 = vmatmul.mubr.bf16.gmra.mrb[0].mxu0 %v315
      %v364 = vpop.f32.mrb[0].mxu0
      %v365 = vadd.f32 0.0, %v364
      %v366 = vpop.f32.mrb[0].mxu0
      %v367 = vadd.f32 0.0, %v366
      %v368 = vpop.f32.mrb[0].mxu0
      %v369 = vadd.f32 0.0, %v368
      %v370 = vpop.f32.mrb[0].mxu0
      %v371 = vadd.f32 0.0, %v370
      %372 = vmatprep.mubr.bf16.mxu0 0
      %373 = vmatmul.mubr.bf16.gmra.mrb[0].mxu0 %v318
      %v374 = vpop.f32.mrb[0].mxu0
      %v375 = vadd.f32 0.0, %v374
      %v376 = vpop.f32.mrb[0].mxu0
      %v377 = vadd.f32 0.0, %v376
      %v378 = vpop.f32.mrb[0].mxu0
      %v379 = vadd.f32 0.0, %v378
      %v380 = vpop.f32.mrb[0].mxu0
      %v381 = vadd.f32 0.0, %v380
      %382 = vdwg.mxu0
      %383 = vmatprep.subr.bf16.mxu0 0
      %384 = vmatpush1.bf16.msra.mxu0 %v328
      %385 = vmatprep.subr.bf16.mxu0 0
      %386 = vmatpush1.bf16.msra.mxu0 0
      %387 = vmatprep.subr.bf16.mxu0 0
      %388 = vmatpush1.bf16.msra.mxu0 0
      %389 = vmatprep.subr.bf16.mxu0 0
      %390 = vmatpush1.bf16.msra.mxu0 0
      %391 = vmatprep.subr.bf16.mxu0 0
      %392 = vmatpush1.bf16.msra.mxu0 0
      %393 = vmatprep.subr.bf16.mxu0 0
      %394 = vmatpush1.bf16.msra.mxu0 0
      %395 = vmatprep.subr.bf16.mxu0 0
      %396 = vmatpush1.bf16.msra.mxu0 0
      %397 = vmatprep.subr.bf16.mxu0 0
      %398 = vmatpush1.bf16.msra.mxu0 0
      %399 = vmatprep.subr.bf16.mxu0 0
      %400 = vmatpush1.bf16.msra.mxu0 0
      %401 = vmatprep.subr.bf16.mxu0 0
      %402 = vmatpush1.bf16.msra.mxu0 0
      %403 = vmatprep.subr.bf16.mxu0 0
      %404 = vmatpush1.bf16.msra.mxu0 0
      %405 = vmatprep.subr.bf16.mxu0 0
      %406 = vmatpush1.bf16.msra.mxu0 0
      %407 = vmatprep.subr.bf16.mxu0 0
      %408 = vmatpush1.bf16.msra.mxu0 0
      %409 = vmatprep.subr.bf16.mxu0 0
      %410 = vmatpush1.bf16.msra.mxu0 0
      %411 = vmatprep.subr.bf16.mxu0 0
      %412 = vmatpush1.bf16.msra.mxu0 0
      %413 = vmatprep.subr.bf16.mxu0 0
      %414 = vmatpush1.bf16.msra.mxu0 0
      %415 = vmatprep.mubr.bf16.mxu0 0
      %416 = vmatmul.mubr.bf16.gmra.mrb[0].mxu0 %v315
      %v417 = vpop.f32.mrb[0].mxu0
      %v418 = vadd.f32 0.0, %v417
      %v419 = vpop.f32.mrb[0].mxu0
      %v420 = vpop.f32.mrb[0].mxu0
      %v421 = vadd.f32 0.0, %v420
      %v422 = vpop.f32.mrb[0].mxu0
      %423 = vmatprep.mubr.bf16.mxu0 0
      %424 = vmatmul.mubr.bf16.gmra.mrb[0].mxu0 %v318
      %v425 = vpop.f32.mrb[0].mxu0
      %v426 = vadd.f32 0.0, %v425
      %v427 = vpop.f32.mrb[0].mxu0
      %v428 = vpop.f32.mrb[0].mxu0
      %v429 = vadd.f32 0.0, %v428
      %v430 = vpop.f32.mrb[0].mxu0
      %431 = vdwg.mxu0
      %v436 = vunpack.c.l.b16 %v263
      %v437 = vunpack.c.l.b16 %v264
      %v438 = vunpack.c.l.b16 %v265
      %v439 = vunpack.c.l.b16 %v266
      %v440 = vpack.c.b16 %v437, %v436
      %v441 = vpack.c.b16 %v439, %v438
      %v443 = vcombine.high %v262, %v262
      %v445 = vunpack.c.l.s4 1983009808
      %v446 = vunpack.c.0.s8 %v445
      %v447 = vlaneseq
      %v448 = vshrl.u32 %v447, 7
      %v449 = vsub.s32 %v446, %v448
      %v450 = vrot.slane %v262, %v449
      %v452 = vunpack.c.l.s4 1983009808
      %v453 = vunpack.c.0.s8 %v452
      %v454 = vlaneseq
      %v455 = vshrl.u32 %v454, 7
      %v456 = vsub.s32 %v453, %v455
      %v457 = vrot.slane %v443, %v456
      %v458 = vcombine.high %v450, %v450
      %v460 = vsel %vm313, %v440, 0
      %v463 = vsel %vm313, %v441, 0
      %v466 = vsel %vm320, %v450, 0
      %v469 = vsel %vm320, %v458, 0
      %v472 = vsel %vm320, %v457, 0
      %474 = vmatprep.subr.bf16.mxu0 %v469
      %475 = vmatpush1.bf16.msra.mxu0 %v466
      %476 = vmatprep.subr.bf16.mxu0 0
      %477 = vmatpush1.bf16.msra.mxu0 0
      %478 = vmatprep.subr.bf16.mxu0 0
      %479 = vmatpush1.bf16.msra.mxu0 0
      %480 = vmatprep.subr.bf16.mxu0 0
      %481 = vmatpush1.bf16.msra.mxu0 0
      %482 = vmatprep.subr.bf16.mxu0 0
      %483 = vmatpush1.bf16.msra.mxu0 0
      %484 = vmatprep.subr.bf16.mxu0 0
      %485 = vmatpush1.bf16.msra.mxu0 0
      %486 = vmatprep.subr.bf16.mxu0 0
      %487 = vmatpush1.bf16.msra.mxu0 0
      %488 = vmatprep.subr.bf16.mxu0 0
      %489 = vmatpush1.bf16.msra.mxu0 0
      %490 = vmatprep.subr.bf16.mxu0 0
      %491 = vmatpush1.bf16.msra.mxu0 0
      %492 = vmatprep.subr.bf16.mxu0 0
      %493 = vmatpush1.bf16.msra.mxu0 0
      %494 = vmatprep.subr.bf16.mxu0 0
      %495 = vmatpush1.bf16.msra.mxu0 0
      %496 = vmatprep.subr.bf16.mxu0 0
      %497 = vmatpush1.bf16.msra.mxu0 0
      %498 = vmatprep.subr.bf16.mxu0 0
      %499 = vmatpush1.bf16.msra.mxu0 0
      %500 = vmatprep.subr.bf16.mxu0 0
      %501 = vmatpush1.bf16.msra.mxu0 0
      %502 = vmatprep.subr.bf16.mxu0 0
      %503 = vmatpush1.bf16.msra.mxu0 0
      %504 = vmatprep.subr.bf16.mxu0 0
      %505 = vmatpush1.bf16.msra.mxu0 0
      %506 = vmatprep.mubr.bf16.mxu0 0
      %507 = vmatmul.mubr.bf16.gmra.mrb[0].mxu0 %v460
      %v508 = vpop.f32.mrb[0].mxu0
      %v509 = vadd.f32 %v365, %v508
      %v510 = vpop.f32.mrb[0].mxu0
      %v511 = vadd.f32 %v367, %v510
      %v512 = vpop.f32.mrb[0].mxu0
      %v513 = vadd.f32 %v369, %v512
      %v514 = vpop.f32.mrb[0].mxu0
      %v515 = vadd.f32 %v371, %v514
      %516 = vmatprep.mubr.bf16.mxu0 0
      %517 = vmatmul.mubr.bf16.gmra.mrb[0].mxu0 %v463
      %v518 = vpop.f32.mrb[0].mxu0
      %v519 = vadd.f32 %v375, %v518
      %v520 = vpop.f32.mrb[0].mxu0
      %v521 = vadd.f32 %v377, %v520
      %v522 = vpop.f32.mrb[0].mxu0
      %v523 = vadd.f32 %v379, %v522
      %v524 = vpop.f32.mrb[0].mxu0
      %v525 = vadd.f32 %v381, %v524
      %526 = vdwg.mxu0
      %527 = vmatprep.subr.bf16.mxu0 0
      %528 = vmatpush1.bf16.msra.mxu0 %v472
      %529 = vmatprep.subr.bf16.mxu0 0
      %530 = vmatpush1.bf16.msra.mxu0 0
      %531 = vmatprep.subr.bf16.mxu0 0
      %532 = vmatpush1.bf16.msra.mxu0 0
      %533 = vmatprep.subr.bf16.mxu0 0
      %534 = vmatpush1.bf16.msra.mxu0 0
      %535 = vmatprep.subr.bf16.mxu0 0
      %536 = vmatpush1.bf16.msra.mxu0 0
      %537 = vmatprep.subr.bf16.mxu0 0
      %538 = vmatpush1.bf16.msra.mxu0 0
      %539 = vmatprep.subr.bf16.mxu0 0
      %540 = vmatpush1.bf16.msra.mxu0 0
      %541 = vmatprep.subr.bf16.mxu0 0
      %542 = vmatpush1.bf16.msra.mxu0 0
      %543 = vmatprep.subr.bf16.mxu0 0
      %544 = vmatpush1.bf16.msra.mxu0 0
      %545 = vmatprep.subr.bf16.mxu0 0
      %546 = vmatpush1.bf16.msra.mxu0 0
      %547 = vmatprep.subr.bf16.mxu0 0
      %548 = vmatpush1.bf16.msra.mxu0 0
      %549 = vmatprep.subr.bf16.mxu0 0
      %550 = vmatpush1.bf16.msra.mxu0 0
      %551 = vmatprep.subr.bf16.mxu0 0
      %552 = vmatpush1.bf16.msra.mxu0 0
      %553 = vmatprep.subr.bf16.mxu0 0
      %554 = vmatpush1.bf16.msra.mxu0 0
      %555 = vmatprep.subr.bf16.mxu0 0
      %556 = vmatpush1.bf16.msra.mxu0 0
      %557 = vmatprep.subr.bf16.mxu0 0
      %558 = vmatpush1.bf16.msra.mxu0 0
      %559 = vmatprep.mubr.bf16.mxu0 0
      %560 = vmatmul.mubr.bf16.gmra.mrb[0].mxu0 %v460
      %v561 = vpop.f32.mrb[0].mxu0
      %v562 = vadd.f32 %v418, %v561
      %v563 = vpop.f32.mrb[0].mxu0
      %v564 = vpop.f32.mrb[0].mxu0
      %v565 = vadd.f32 %v421, %v564
      %v566 = vpop.f32.mrb[0].mxu0
      %567 = vmatprep.mubr.bf16.mxu0 0
      %568 = vmatmul.mubr.bf16.gmra.mrb[0].mxu0 %v463
      %v569 = vpop.f32.mrb[0].mxu0
      %v570 = vadd.f32 %v426, %v569
      %v571 = vpop.f32.mrb[0].mxu0
      %v572 = vpop.f32.mrb[0].mxu0
      %v573 = vadd.f32 %v429, %v572
      %v574 = vpop.f32.mrb[0].mxu0
      %575 = vdwg.mxu0
      %v576 = vld [vmem:[%s251] sm:$0xff]
      %s577 = scalar_lea.vmem %s1, 32
      %v578 = vld [vmem:[%s577] sm:$0xf]
      %v579 = vld [vmem:[%s577 + $0x4] sm:$0xf]
      %v580 = vld [vmem:[%s577 + $0x8] sm:$0xf]
      %v581 = vld [vmem:[%s577 + $0xc] sm:$0xf]
      %v586 = vunpack.c.l.b16 %v578
      %v587 = vunpack.c.l.b16 %v579
      %v588 = vunpack.c.l.b16 %v580
      %v589 = vunpack.c.l.b16 %v581
      %v590 = vpack.c.b16 %v587, %v586
      %v591 = vpack.c.b16 %v589, %v588
      %v593 = vcombine.high %v576, %v576
      %v595 = vunpack.c.l.s4 1983009808
      %v596 = vunpack.c.0.s8 %v595
      %v597 = vlaneseq
      %v598 = vshrl.u32 %v597, 7
      %v599 = vsub.s32 %v596, %v598
      %v600 = vrot.slane %v576, %v599
      %v602 = vunpack.c.l.s4 1983009808
      %v603 = vunpack.c.0.s8 %v602
      %v604 = vlaneseq
      %v605 = vshrl.u32 %v604, 7
      %v606 = vsub.s32 %v603, %v605
      %v607 = vrot.slane %v593, %v606
      %v608 = vcombine.high %v600, %v600
      %v609 = vcombine.high %v607, %v607
      %610 = vrot.lane.b32.xlu0 %v600, 126
      %v611 = vpop.permute.xlu0 %610
      %612 = vrot.lane.b32.xlu0 %v608, 126
      %v613 = vpop.permute.xlu0 %612
      %614 = vrot.lane.b32.xlu0 %v607, 126
      %v615 = vpop.permute.xlu0 %614
      %616 = vrot.lane.b32.xlu0 %v609, 126
      %v617 = vpop.permute.xlu0 %616
      %vm618 = vcmask 1031168
      %v619 = vsel %vm618, %v611, %v613
      %v620 = vsel %vm618, %v613, %v615
      %v621 = vsel %vm618, %v615, %v617
      %v623 = vsel %vm313, %v590, 0
      %v626 = vsel %vm313, %v591, 0
      %v629 = vsel %vm320, %v619, 0
      %v632 = vsel %vm320, %v620, 0
      %v635 = vsel %vm320, %v621, 0
      %637 = vmatprep.subr.bf16.mxu0 %v632
      %638 = vmatpush1.bf16.msra.mxu0 %v629
      %639 = vmatprep.subr.bf16.mxu0 0
      %640 = vmatpush1.bf16.msra.mxu0 0
      %641 = vmatprep.subr.bf16.mxu0 0
      %642 = vmatpush1.bf16.msra.mxu0 0
      %643 = vmatprep.subr.bf16.mxu0 0
      %644 = vmatpush1.bf16.msra.mxu0 0
      %645 = vmatprep.subr.bf16.mxu0 0
      %646 = vmatpush1.bf16.msra.mxu0 0
      %647 = vmatprep.subr.bf16.mxu0 0
      %648 = vmatpush1.bf16.msra.mxu0 0
      %649 = vmatprep.subr.bf16.mxu0 0
      %650 = vmatpush1.bf16.msra.mxu0 0
      %651 = vmatprep.subr.bf16.mxu0 0
      %652 = vmatpush1.bf16.msra.mxu0 0
      %653 = vmatprep.subr.bf16.mxu0 0
      %654 = vmatpush1.bf16.msra.mxu0 0
      %655 = vmatprep.subr.bf16.mxu0 0
      %656 = vmatpush1.bf16.msra.mxu0 0
      %657 = vmatprep.subr.bf16.mxu0 0
      %658 = vmatpush1.bf16.msra.mxu0 0
      %659 = vmatprep.subr.bf16.mxu0 0
      %660 = vmatpush1.bf16.msra.mxu0 0
      %661 = vmatprep.subr.bf16.mxu0 0
      %662 = vmatpush1.bf16.msra.mxu0 0
      %663 = vmatprep.subr.bf16.mxu0 0
      %664 = vmatpush1.bf16.msra.mxu0 0
      %665 = vmatprep.subr.bf16.mxu0 0
      %666 = vmatpush1.bf16.msra.mxu0 0
      %667 = vmatprep.subr.bf16.mxu0 0
      %668 = vmatpush1.bf16.msra.mxu0 0
      %669 = vmatprep.mubr.bf16.mxu0 0
      %670 = vmatmul.mubr.bf16.gmra.mrb[0].mxu0 %v623
      %v671 = vpop.f32.mrb[0].mxu0
      %v672 = vadd.f32 0.0, %v671
      %v673 = vpop.f32.mrb[0].mxu0
      %v674 = vadd.f32 0.0, %v673
      %v675 = vpop.f32.mrb[0].mxu0
      %v676 = vadd.f32 0.0, %v675
      %v677 = vpop.f32.mrb[0].mxu0
      %v678 = vadd.f32 0.0, %v677
      %679 = vmatprep.mubr.bf16.mxu0 0
      %680 = vmatmul.mubr.bf16.gmra.mrb[0].mxu0 %v626
      %v681 = vpop.f32.mrb[0].mxu0
      %v682 = vadd.f32 0.0, %v681
      %v683 = vpop.f32.mrb[0].mxu0
      %v684 = vadd.f32 0.0, %v683
      %v685 = vpop.f32.mrb[0].mxu0
      %v686 = vadd.f32 0.0, %v685
      %v687 = vpop.f32.mrb[0].mxu0
      %v688 = vadd.f32 0.0, %v687
      %689 = vdwg.mxu0
      %690 = vmatprep.subr.bf16.mxu0 0
      %691 = vmatpush1.bf16.msra.mxu0 %v635
      %692 = vmatprep.subr.bf16.mxu0 0
      %693 = vmatpush1.bf16.msra.mxu0 0
      %694 = vmatprep.subr.bf16.mxu0 0
      %695 = vmatpush1.bf16.msra.mxu0 0
      %696 = vmatprep.subr.bf16.mxu0 0
      %697 = vmatpush1.bf16.msra.mxu0 0
      %698 = vmatprep.subr.bf16.mxu0 0
      %699 = vmatpush1.bf16.msra.mxu0 0
      %700 = vmatprep.subr.bf16.mxu0 0
      %701 = vmatpush1.bf16.msra.mxu0 0
      %702 = vmatprep.subr.bf16.mxu0 0
      %703 = vmatpush1.bf16.msra.mxu0 0
      %704 = vmatprep.subr.bf16.mxu0 0
      %705 = vmatpush1.bf16.msra.mxu0 0
      %706 = vmatprep.subr.bf16.mxu0 0
      %707 = vmatpush1.bf16.msra.mxu0 0
      %708 = vmatprep.subr.bf16.mxu0 0
      %709 = vmatpush1.bf16.msra.mxu0 0
      %710 = vmatprep.subr.bf16.mxu0 0
      %711 = vmatpush1.bf16.msra.mxu0 0
      %712 = vmatprep.subr.bf16.mxu0 0
      %713 = vmatpush1.bf16.msra.mxu0 0
      %714 = vmatprep.subr.bf16.mxu0 0
      %715 = vmatpush1.bf16.msra.mxu0 0
      %716 = vmatprep.subr.bf16.mxu0 0
      %717 = vmatpush1.bf16.msra.mxu0 0
      %718 = vmatprep.subr.bf16.mxu0 0
      %719 = vmatpush1.bf16.msra.mxu0 0
      %720 = vmatprep.subr.bf16.mxu0 0
      %721 = vmatpush1.bf16.msra.mxu0 0
      %722 = vmatprep.mubr.bf16.mxu0 0
      %723 = vmatmul.mubr.bf16.gmra.mrb[0].mxu0 %v623
      %v724 = vpop.f32.mrb[0].mxu0
      %v725 = vadd.f32 0.0, %v724
      %v726 = vpop.f32.mrb[0].mxu0
      %v727 = vpop.f32.mrb[0].mxu0
      %v728 = vadd.f32 0.0, %v727
      %v729 = vpop.f32.mrb[0].mxu0
      %730 = vmatprep.mubr.bf16.mxu0 0
      %731 = vmatmul.mubr.bf16.gmra.mrb[0].mxu0 %v626
      %v732 = vpop.f32.mrb[0].mxu0
      %v733 = vadd.f32 0.0, %v732
      %v734 = vpop.f32.mrb[0].mxu0
      %v735 = vpop.f32.mrb[0].mxu0
      %v736 = vadd.f32 0.0, %v735
      %v737 = vpop.f32.mrb[0].mxu0
      %738 = vdwg.mxu0
      %v739 = vadd.f32 %v509, %v672
      %v740 = vadd.f32 %v511, %v674
      %v741 = vadd.f32 %v562, %v725
      %v742 = vadd.f32 %v513, %v676
      %v743 = vadd.f32 %v515, %v678
      %v744 = vadd.f32 %v565, %v728
      %v745 = vadd.f32 %v519, %v682
      %v746 = vadd.f32 %v521, %v684
      %v747 = vadd.f32 %v570, %v733
      %v748 = vadd.f32 %v523, %v686
      %v749 = vadd.f32 %v525, %v688
      %v750 = vadd.f32 %v573, %v736
      %v751 = vld [vmem:[%s251] sm:$0xff]
      %s752 = scalar_lea.vmem %s1, 48
      %v753 = vld [vmem:[%s752] sm:$0xf]
      %v754 = vld [vmem:[%s752 + $0x4] sm:$0xf]
      %v755 = vld [vmem:[%s752 + $0x8] sm:$0xf]
      %v756 = vld [vmem:[%s752 + $0xc] sm:$0xf]
      %v761 = vunpack.c.l.b16 %v753
      %v762 = vunpack.c.l.b16 %v754
      %v763 = vunpack.c.l.b16 %v755
      %v764 = vunpack.c.l.b16 %v756
      %v765 = vpack.c.b16 %v762, %v761
      %v766 = vpack.c.b16 %v764, %v763
      %v768 = vcombine.high %v751, %v751
      %v770 = vunpack.c.l.s4 1983009808
      %v771 = vunpack.c.0.s8 %v770
      %v772 = vlaneseq
      %v773 = vshrl.u32 %v772, 7
      %v774 = vsub.s32 %v771, %v773
      %v775 = vrot.slane %v751, %v774
      %v777 = vunpack.c.l.s4 1983009808
      %v778 = vunpack.c.0.s8 %v777
      %v779 = vlaneseq
      %v780 = vshrl.u32 %v779, 7
      %v781 = vsub.s32 %v778, %v780
      %v782 = vrot.slane %v768, %v781
      %v783 = vcombine.high %v775, %v775
      %v784 = vcombine.high %v782, %v782
      %785 = vrot.lane.b32.xlu0 %v775, 110
      %v786 = vpop.permute.xlu0 %785
      %787 = vrot.lane.b32.xlu0 %v783, 110
      %v788 = vpop.permute.xlu0 %787
      %789 = vrot.lane.b32.xlu0 %v782, 110
      %v790 = vpop.permute.xlu0 %789
      %791 = vrot.lane.b32.xlu0 %v784, 110
      %v792 = vpop.permute.xlu0 %791
      %vm793 = vcmask 900096
      %v794 = vsel %vm793, %v786, %v788
      %v795 = vsel %vm793, %v788, %v790
      %v796 = vsel %vm793, %v790, %v792
      %v798 = vsel %vm313, %v765, 0
      %v801 = vsel %vm313, %v766, 0
      %v804 = vsel %vm320, %v794, 0
      %v807 = vsel %vm320, %v795, 0
      %v810 = vsel %vm320, %v796, 0
      %812 = vmatprep.subr.bf16.mxu0 %v807
      %813 = vmatpush1.bf16.msra.mxu0 %v804
      %814 = vmatprep.subr.bf16.mxu0 0
      %815 = vmatpush1.bf16.msra.mxu0 0
      %816 = vmatprep.subr.bf16.mxu0 0
      %817 = vmatpush1.bf16.msra.mxu0 0
      %818 = vmatprep.subr.bf16.mxu0 0
      %819 = vmatpush1.bf16.msra.mxu0 0
      %820 = vmatprep.subr.bf16.mxu0 0
      %821 = vmatpush1.bf16.msra.mxu0 0
      %822 = vmatprep.subr.bf16.mxu0 0
      %823 = vmatpush1.bf16.msra.mxu0 0
      %824 = vmatprep.subr.bf16.mxu0 0
      %825 = vmatpush1.bf16.msra.mxu0 0
      %826 = vmatprep.subr.bf16.mxu0 0
      %827 = vmatpush1.bf16.msra.mxu0 0
      %828 = vmatprep.subr.bf16.mxu0 0
      %829 = vmatpush1.bf16.msra.mxu0 0
      %830 = vmatprep.subr.bf16.mxu0 0
      %831 = vmatpush1.bf16.msra.mxu0 0
      %832 = vmatprep.subr.bf16.mxu0 0
      %833 = vmatpush1.bf16.msra.mxu0 0
      %834 = vmatprep.subr.bf16.mxu0 0
      %835 = vmatpush1.bf16.msra.mxu0 0
      %836 = vmatprep.subr.bf16.mxu0 0
      %837 = vmatpush1.bf16.msra.mxu0 0
      %838 = vmatprep.subr.bf16.mxu0 0
      %839 = vmatpush1.bf16.msra.mxu0 0
      %840 = vmatprep.subr.bf16.mxu0 0
      %841 = vmatpush1.bf16.msra.mxu0 0
      %842 = vmatprep.subr.bf16.mxu0 0
      %843 = vmatpush1.bf16.msra.mxu0 0
      %844 = vmatprep.mubr.bf16.mxu0 0
      %845 = vmatmul.mubr.bf16.gmra.mrb[0].mxu0 %v798
      %v846 = vpop.f32.mrb[0].mxu0
      %v847 = vadd.f32 0.0, %v846
      %v848 = vpop.f32.mrb[0].mxu0
      %v849 = vadd.f32 0.0, %v848
      %v850 = vpop.f32.mrb[0].mxu0
      %v851 = vadd.f32 0.0, %v850
      %v852 = vpop.f32.mrb[0].mxu0
      %v853 = vadd.f32 0.0, %v852
      %854 = vmatprep.mubr.bf16.mxu0 0
      %855 = vmatmul.mubr.bf16.gmra.mrb[0].mxu0 %v801
      %v856 = vpop.f32.mrb[0].mxu0
      %v857 = vadd.f32 0.0, %v856
      %v858 = vpop.f32.mrb[0].mxu0
      %v859 = vadd.f32 0.0, %v858
      %v860 = vpop.f32.mrb[0].mxu0
      %v861 = vadd.f32 0.0, %v860
      %v862 = vpop.f32.mrb[0].mxu0
      %v863 = vadd.f32 0.0, %v862
      %864 = vdwg.mxu0
      %865 = vmatprep.subr.bf16.mxu0 0
      %866 = vmatpush1.bf16.msra.mxu0 %v810
      %867 = vmatprep.subr.bf16.mxu0 0
      %868 = vmatpush1.bf16.msra.mxu0 0
      %869 = vmatprep.subr.bf16.mxu0 0
      %870 = vmatpush1.bf16.msra.mxu0 0
      %871 = vmatprep.subr.bf16.mxu0 0
      %872 = vmatpush1.bf16.msra.mxu0 0
      %873 = vmatprep.subr.bf16.mxu0 0
      %874 = vmatpush1.bf16.msra.mxu0 0
      %875 = vmatprep.subr.bf16.mxu0 0
      %876 = vmatpush1.bf16.msra.mxu0 0
      %877 = vmatprep.subr.bf16.mxu0 0
      %878 = vmatpush1.bf16.msra.mxu0 0
      %879 = vmatprep.subr.bf16.mxu0 0
      %880 = vmatpush1.bf16.msra.mxu0 0
      %881 = vmatprep.subr.bf16.mxu0 0
      %882 = vmatpush1.bf16.msra.mxu0 0
      %883 = vmatprep.subr.bf16.mxu0 0
      %884 = vmatpush1.bf16.msra.mxu0 0
      %885 = vmatprep.subr.bf16.mxu0 0
      %886 = vmatpush1.bf16.msra.mxu0 0
      %887 = vmatprep.subr.bf16.mxu0 0
      %888 = vmatpush1.bf16.msra.mxu0 0
      %889 = vmatprep.subr.bf16.mxu0 0
      %890 = vmatpush1.bf16.msra.mxu0 0
      %891 = vmatprep.subr.bf16.mxu0 0
      %892 = vmatpush1.bf16.msra.mxu0 0
      %893 = vmatprep.subr.bf16.mxu0 0
      %894 = vmatpush1.bf16.msra.mxu0 0
      %895 = vmatprep.subr.bf16.mxu0 0
      %896 = vmatpush1.bf16.msra.mxu0 0
      %897 = vmatprep.mubr.bf16.mxu0 0
      %898 = vmatmul.mubr.bf16.gmra.mrb[0].mxu0 %v798
      %v899 = vpop.f32.mrb[0].mxu0
      %v900 = vadd.f32 0.0, %v899
      %v901 = vpop.f32.mrb[0].mxu0
      %v902 = vpop.f32.mrb[0].mxu0
      %v903 = vadd.f32 0.0, %v902
      %v904 = vpop.f32.mrb[0].mxu0
      %905 = vmatprep.mubr.bf16.mxu0 0
      %906 = vmatmul.mubr.bf16.gmra.mrb[0].mxu0 %v801
      %v907 = vpop.f32.mrb[0].mxu0
      %v908 = vadd.f32 0.0, %v907
      %v909 = vpop.f32.mrb[0].mxu0
      %v910 = vpop.f32.mrb[0].mxu0
      %v911 = vadd.f32 0.0, %v910
      %v912 = vpop.f32.mrb[0].mxu0
      %913 = vdwg.mxu0
      %v914 = vadd.f32 %v739, %v847
      %v915 = vadd.f32 %v740, %v849
      %v916 = vadd.f32 %v741, %v900
      %v917 = vadd.f32 %v742, %v851
      %v918 = vadd.f32 %v743, %v853
      %v919 = vadd.f32 %v744, %v903
      %v920 = vadd.f32 %v745, %v857
      %v921 = vadd.f32 %v746, %v859
      %v922 = vadd.f32 %v747, %v908
      %v923 = vadd.f32 %v748, %v861
      %v924 = vadd.f32 %v749, %v863
      %v925 = vadd.f32 %v750, %v911
      %v926 = vld [vmem:[%s251] sm:$0xff]
      %s927 = scalar_lea.vmem %s1, 64
      %v928 = vld [vmem:[%s927] sm:$0xf]
      %v929 = vld [vmem:[%s927 + $0x4] sm:$0xf]
      %v930 = vld [vmem:[%s927 + $0x8] sm:$0xf]
      %v931 = vld [vmem:[%s927 + $0xc] sm:$0xf]
      %v936 = vunpack.c.l.b16 %v928
      %v937 = vunpack.c.l.b16 %v929
      %v938 = vunpack.c.l.b16 %v930
      %v939 = vunpack.c.l.b16 %v931
      %v940 = vpack.c.b16 %v937, %v936
      %v941 = vpack.c.b16 %v939, %v938
      %v943 = vcombine.high %v926, %v926
      %v945 = vunpack.c.l.s4 1983009808
      %v946 = vunpack.c.0.s8 %v945
      %v947 = vlaneseq
      %v948 = vshrl.u32 %v947, 7
      %v949 = vsub.s32 %v946, %v948
      %v950 = vrot.slane %v926, %v949
      %v952 = vunpack.c.l.s4 1983009808
      %v953 = vunpack.c.0.s8 %v952
      %v954 = vlaneseq
      %v955 = vshrl.u32 %v954, 7
      %v956 = vsub.s32 %v953, %v955
      %v957 = vrot.slane %v943, %v956
      %v958 = vcombine.high %v950, %v950
      %v959 = vcombine.high %v957, %v957
      %960 = vrot.lane.b32.xlu0 %v950, 109
      %v961 = vpop.permute.xlu0 %960
      %962 = vrot.lane.b32.xlu0 %v958, 109
      %v963 = vpop.permute.xlu0 %962
      %964 = vrot.lane.b32.xlu0 %v957, 109
      %v965 = vpop.permute.xlu0 %964
      %966 = vrot.lane.b32.xlu0 %v959, 109
      %v967 = vpop.permute.xlu0 %966
      %vm968 = vcmask 891904
      %v969 = vsel %vm968, %v961, %v963
      %v970 = vsel %vm968, %v963, %v965
      %v971 = vsel %vm968, %v965, %v967
      %v973 = vsel %vm313, %v940, 0
      %v976 = vsel %vm313, %v941, 0
      %v979 = vsel %vm320, %v969, 0
      %v982 = vsel %vm320, %v970, 0
      %v985 = vsel %vm320, %v971, 0
      %987 = vmatprep.subr.bf16.mxu0 %v982
      %988 = vmatpush1.bf16.msra.mxu0 %v979
      %989 = vmatprep.subr.bf16.mxu0 0
      %990 = vmatpush1.bf16.msra.mxu0 0
      %991 = vmatprep.subr.bf16.mxu0 0
      %992 = vmatpush1.bf16.msra.mxu0 0
      %993 = vmatprep.subr.bf16.mxu0 0
      %994 = vmatpush1.bf16.msra.mxu0 0
      %995 = vmatprep.subr.bf16.mxu0 0
      %996 = vmatpush1.bf16.msra.mxu0 0
      %997 = vmatprep.subr.bf16.mxu0 0
      %998 = vmatpush1.bf16.msra.mxu0 0
      %999 = vmatprep.subr.bf16.mxu0 0
      %1000 = vmatpush1.bf16.msra.mxu0 0
      %1001 = vmatprep.subr.bf16.mxu0 0
      %1002 = vmatpush1.bf16.msra.mxu0 0
      %1003 = vmatprep.subr.bf16.mxu0 0
      %1004 = vmatpush1.bf16.msra.mxu0 0
      %1005 = vmatprep.subr.bf16.mxu0 0
      %1006 = vmatpush1.bf16.msra.mxu0 0
      %1007 = vmatprep.subr.bf16.mxu0 0
      %1008 = vmatpush1.bf16.msra.mxu0 0
      %1009 = vmatprep.subr.bf16.mxu0 0
      %1010 = vmatpush1.bf16.msra.mxu0 0
      %1011 = vmatprep.subr.bf16.mxu0 0
      %1012 = vmatpush1.bf16.msra.mxu0 0
      %1013 = vmatprep.subr.bf16.mxu0 0
      %1014 = vmatpush1.bf16.msra.mxu0 0
      %1015 = vmatprep.subr.bf16.mxu0 0
      %1016 = vmatpush1.bf16.msra.mxu0 0
      %1017 = vmatprep.subr.bf16.mxu0 0
      %1018 = vmatpush1.bf16.msra.mxu0 0
      %1019 = vmatprep.mubr.bf16.mxu0 0
      %1020 = vmatmul.mubr.bf16.gmra.mrb[0].mxu0 %v973
      %v1021 = vpop.f32.mrb[0].mxu0
      %v1022 = vadd.f32 0.0, %v1021
      %v1023 = vpop.f32.mrb[0].mxu0
      %v1024 = vadd.f32 0.0, %v1023
      %v1025 = vpop.f32.mrb[0].mxu0
      %v1026 = vadd.f32 0.0, %v1025
      %v1027 = vpop.f32.mrb[0].mxu0
      %v1028 = vadd.f32 0.0, %v1027
      %1029 = vmatprep.mubr.bf16.mxu0 0
      %1030 = vmatmul.mubr.bf16.gmra.mrb[0].mxu0 %v976
      %v1031 = vpop.f32.mrb[0].mxu0
      %v1032 = vadd.f32 0.0, %v1031
      %v1033 = vpop.f32.mrb[0].mxu0
      %v1034 = vadd.f32 0.0, %v1033
      %v1035 = vpop.f32.mrb[0].mxu0
      %v1036 = vadd.f32 0.0, %v1035
      %v1037 = vpop.f32.mrb[0].mxu0
      %v1038 = vadd.f32 0.0, %v1037
      %1039 = vdwg.mxu0
      %1040 = vmatprep.subr.bf16.mxu0 0
      %1041 = vmatpush1.bf16.msra.mxu0 %v985
      %1042 = vmatprep.subr.bf16.mxu0 0
      %1043 = vmatpush1.bf16.msra.mxu0 0
      %1044 = vmatprep.subr.bf16.mxu0 0
      %1045 = vmatpush1.bf16.msra.mxu0 0
      %1046 = vmatprep.subr.bf16.mxu0 0
      %1047 = vmatpush1.bf16.msra.mxu0 0
      %1048 = vmatprep.subr.bf16.mxu0 0
      %1049 = vmatpush1.bf16.msra.mxu0 0
      %1050 = vmatprep.subr.bf16.mxu0 0
      %1051 = vmatpush1.bf16.msra.mxu0 0
      %1052 = vmatprep.subr.bf16.mxu0 0
      %1053 = vmatpush1.bf16.msra.mxu0 0
      %1054 = vmatprep.subr.bf16.mxu0 0
      %1055 = vmatpush1.bf16.msra.mxu0 0
      %1056 = vmatprep.subr.bf16.mxu0 0
      %1057 = vmatpush1.bf16.msra.mxu0 0
      %1058 = vmatprep.subr.bf16.mxu0 0
      %1059 = vmatpush1.bf16.msra.mxu0 0
      %1060 = vmatprep.subr.bf16.mxu0 0
      %1061 = vmatpush1.bf16.msra.mxu0 0
      %1062 = vmatprep.subr.bf16.mxu0 0
      %1063 = vmatpush1.bf16.msra.mxu0 0
      %1064 = vmatprep.subr.bf16.mxu0 0
      %1065 = vmatpush1.bf16.msra.mxu0 0
      %1066 = vmatprep.subr.bf16.mxu0 0
      %1067 = vmatpush1.bf16.msra.mxu0 0
      %1068 = vmatprep.subr.bf16.mxu0 0
      %1069 = vmatpush1.bf16.msra.mxu0 0
      %1070 = vmatprep.subr.bf16.mxu0 0
      %1071 = vmatpush1.bf16.msra.mxu0 0
      %1072 = vmatprep.mubr.bf16.mxu0 0
      %1073 = vmatmul.mubr.bf16.gmra.mrb[0].mxu0 %v973
      %v1074 = vpop.f32.mrb[0].mxu0
      %v1075 = vadd.f32 0.0, %v1074
      %v1076 = vpop.f32.mrb[0].mxu0
      %v1077 = vpop.f32.mrb[0].mxu0
      %v1078 = vadd.f32 0.0, %v1077
      %v1079 = vpop.f32.mrb[0].mxu0
      %1080 = vmatprep.mubr.bf16.mxu0 0
      %1081 = vmatmul.mubr.bf16.gmra.mrb[0].mxu0 %v976
      %v1082 = vpop.f32.mrb[0].mxu0
      %v1083 = vadd.f32 0.0, %v1082
      %v1084 = vpop.f32.mrb[0].mxu0
      %v1085 = vpop.f32.mrb[0].mxu0
      %v1086 = vadd.f32 0.0, %v1085
      %v1087 = vpop.f32.mrb[0].mxu0
      %1088 = vdwg.mxu0
      %v1089 = vadd.f32 %v914, %v1022
      %v1090 = vadd.f32 %v915, %v1024
      %v1091 = vadd.f32 %v916, %v1075
      %v1092 = vadd.f32 %v917, %v1026
      %v1093 = vadd.f32 %v918, %v1028
      %v1094 = vadd.f32 %v919, %v1078
      %v1095 = vadd.f32 %v920, %v1032
      %v1096 = vadd.f32 %v921, %v1034
      %v1097 = vadd.f32 %v922, %v1083
      %v1098 = vadd.f32 %v923, %v1036
      %v1099 = vadd.f32 %v924, %v1038
      %v1100 = vadd.f32 %v925, %v1086
      %v1101 = vld [vmem:[%s251] sm:$0xff]
      %s1102 = scalar_lea.vmem %s1, 80
      %v1103 = vld [vmem:[%s1102] sm:$0xf]
      %v1104 = vld [vmem:[%s1102 + $0x4] sm:$0xf]
      %v1105 = vld [vmem:[%s1102 + $0x8] sm:$0xf]
      %v1106 = vld [vmem:[%s1102 + $0xc] sm:$0xf]
      %v1111 = vunpack.c.l.b16 %v1103
      %v1112 = vunpack.c.l.b16 %v1104
      %v1113 = vunpack.c.l.b16 %v1105
      %v1114 = vunpack.c.l.b16 %v1106
      %v1115 = vpack.c.b16 %v1112, %v1111
      %v1116 = vpack.c.b16 %v1114, %v1113
      %v1118 = vcombine.high %v1101, %v1101
      %v1120 = vunpack.c.l.s4 1983009808
      %v1121 = vunpack.c.0.s8 %v1120
      %v1122 = vlaneseq
      %v1123 = vshrl.u32 %v1122, 7
      %v1124 = vsub.s32 %v1121, %v1123
      %v1125 = vrot.slane %v1101, %v1124
      %v1127 = vunpack.c.l.s4 1983009808
      %v1128 = vunpack.c.0.s8 %v1127
      %v1129 = vlaneseq
      %v1130 = vshrl.u32 %v1129, 7
      %v1131 = vsub.s32 %v1128, %v1130
      %v1132 = vrot.slane %v1118, %v1131
      %v1133 = vcombine.high %v1125, %v1125
      %v1134 = vcombine.high %v1132, %v1132
      %1135 = vrot.lane.b32.xlu0 %v1125, 108
      %v1136 = vpop.permute.xlu0 %1135
      %1137 = vrot.lane.b32.xlu0 %v1133, 108
      %v1138 = vpop.permute.xlu0 %1137
      %1139 = vrot.lane.b32.xlu0 %v1132, 108
      %v1140 = vpop.permute.xlu0 %1139
      %1141 = vrot.lane.b32.xlu0 %v1134, 108
      %v1142 = vpop.permute.xlu0 %1141
      %vm1143 = vcmask 883712
      %v1144 = vsel %vm1143, %v1136, %v1138
      %v1145 = vsel %vm1143, %v1138, %v1140
      %v1146 = vsel %vm1143, %v1140, %v1142
      %v1148 = vsel %vm313, %v1115, 0
      %v1151 = vsel %vm313, %v1116, 0
      %v1154 = vsel %vm320, %v1144, 0
      %v1157 = vsel %vm320, %v1145, 0
      %v1160 = vsel %vm320, %v1146, 0
      %1162 = vmatprep.subr.bf16.mxu0 %v1157
      %1163 = vmatpush1.bf16.msra.mxu0 %v1154
      %1164 = vmatprep.subr.bf16.mxu0 0
      %1165 = vmatpush1.bf16.msra.mxu0 0
      %1166 = vmatprep.subr.bf16.mxu0 0
      %1167 = vmatpush1.bf16.msra.mxu0 0
      %1168 = vmatprep.subr.bf16.mxu0 0
      %1169 = vmatpush1.bf16.msra.mxu0 0
      %1170 = vmatprep.subr.bf16.mxu0 0
      %1171 = vmatpush1.bf16.msra.mxu0 0
      %1172 = vmatprep.subr.bf16.mxu0 0
      %1173 = vmatpush1.bf16.msra.mxu0 0
      %1174 = vmatprep.subr.bf16.mxu0 0
      %1175 = vmatpush1.bf16.msra.mxu0 0
      %1176 = vmatprep.subr.bf16.mxu0 0
      %1177 = vmatpush1.bf16.msra.mxu0 0
      %1178 = vmatprep.subr.bf16.mxu0 0
      %1179 = vmatpush1.bf16.msra.mxu0 0
      %1180 = vmatprep.subr.bf16.mxu0 0
      %1181 = vmatpush1.bf16.msra.mxu0 0
      %1182 = vmatprep.subr.bf16.mxu0 0
      %1183 = vmatpush1.bf16.msra.mxu0 0
      %1184 = vmatprep.subr.bf16.mxu0 0
      %1185 = vmatpush1.bf16.msra.mxu0 0
      %1186 = vmatprep.subr.bf16.mxu0 0
      %1187 = vmatpush1.bf16.msra.mxu0 0
      %1188 = vmatprep.subr.bf16.mxu0 0
      %1189 = vmatpush1.bf16.msra.mxu0 0
      %1190 = vmatprep.subr.bf16.mxu0 0
      %1191 = vmatpush1.bf16.msra.mxu0 0
      %1192 = vmatprep.subr.bf16.mxu0 0
      %1193 = vmatpush1.bf16.msra.mxu0 0
      %1194 = vmatprep.mubr.bf16.mxu0 0
      %1195 = vmatmul.mubr.bf16.gmra.mrb[0].mxu0 %v1148
      %v1196 = vpop.f32.mrb[0].mxu0
      %v1197 = vadd.f32 0.0, %v1196
      %v1198 = vpop.f32.mrb[0].mxu0
      %v1199 = vadd.f32 0.0, %v1198
      %v1200 = vpop.f32.mrb[0].mxu0
      %v1201 = vadd.f32 0.0, %v1200
      %v1202 = vpop.f32.mrb[0].mxu0
      %v1203 = vadd.f32 0.0, %v1202
      %1204 = vmatprep.mubr.bf16.mxu0 0
      %1205 = vmatmul.mubr.bf16.gmra.mrb[0].mxu0 %v1151
      %v1206 = vpop.f32.mrb[0].mxu0
      %v1207 = vadd.f32 0.0, %v1206
      %v1208 = vpop.f32.mrb[0].mxu0
      %v1209 = vadd.f32 0.0, %v1208
      %v1210 = vpop.f32.mrb[0].mxu0
      %v1211 = vadd.f32 0.0, %v1210
      %v1212 = vpop.f32.mrb[0].mxu0
      %v1213 = vadd.f32 0.0, %v1212
      %1214 = vdwg.mxu0
      %1215 = vmatprep.subr.bf16.mxu0 0
      %1216 = vmatpush1.bf16.msra.mxu0 %v1160
      %1217 = vmatprep.subr.bf16.mxu0 0
      %1218 = vmatpush1.bf16.msra.mxu0 0
      %1219 = vmatprep.subr.bf16.mxu0 0
      %1220 = vmatpush1.bf16.msra.mxu0 0
      %1221 = vmatprep.subr.bf16.mxu0 0
      %1222 = vmatpush1.bf16.msra.mxu0 0
      %1223 = vmatprep.subr.bf16.mxu0 0
      %1224 = vmatpush1.bf16.msra.mxu0 0
      %1225 = vmatprep.subr.bf16.mxu0 0
      %1226 = vmatpush1.bf16.msra.mxu0 0
      %1227 = vmatprep.subr.bf16.mxu0 0
      %1228 = vmatpush1.bf16.msra.mxu0 0
      %1229 = vmatprep.subr.bf16.mxu0 0
      %1230 = vmatpush1.bf16.msra.mxu0 0
      %1231 = vmatprep.subr.bf16.mxu0 0
      %1232 = vmatpush1.bf16.msra.mxu0 0
      %1233 = vmatprep.subr.bf16.mxu0 0
      %1234 = vmatpush1.bf16.msra.mxu0 0
      %1235 = vmatprep.subr.bf16.mxu0 0
      %1236 = vmatpush1.bf16.msra.mxu0 0
      %1237 = vmatprep.subr.bf16.mxu0 0
      %1238 = vmatpush1.bf16.msra.mxu0 0
      %1239 = vmatprep.subr.bf16.mxu0 0
      %1240 = vmatpush1.bf16.msra.mxu0 0
      %1241 = vmatprep.subr.bf16.mxu0 0
      %1242 = vmatpush1.bf16.msra.mxu0 0
      %1243 = vmatprep.subr.bf16.mxu0 0
      %1244 = vmatpush1.bf16.msra.mxu0 0
      %1245 = vmatprep.subr.bf16.mxu0 0
      %1246 = vmatpush1.bf16.msra.mxu0 0
      %1247 = vmatprep.mubr.bf16.mxu0 0
      %1248 = vmatmul.mubr.bf16.gmra.mrb[0].mxu0 %v1148
      %v1249 = vpop.f32.mrb[0].mxu0
      %v1250 = vadd.f32 0.0, %v1249
      %v1251 = vpop.f32.mrb[0].mxu0
      %v1252 = vpop.f32.mrb[0].mxu0
      %v1253 = vadd.f32 0.0, %v1252
      %v1254 = vpop.f32.mrb[0].mxu0
      %1255 = vmatprep.mubr.bf16.mxu0 0
      %1256 = vmatmul.mubr.bf16.gmra.mrb[0].mxu0 %v1151
      %v1257 = vpop.f32.mrb[0].mxu0
      %v1258 = vadd.f32 0.0, %v1257
      %v1259 = vpop.f32.mrb[0].mxu0
      %v1260 = vpop.f32.mrb[0].mxu0
      %v1261 = vadd.f32 0.0, %v1260
      %v1262 = vpop.f32.mrb[0].mxu0
      %1263 = vdwg.mxu0
      %v1264 = vadd.f32 %v1089, %v1197
      %v1265 = vadd.f32 %v1090, %v1199
      %v1266 = vadd.f32 %v1091, %v1250
      %v1267 = vadd.f32 %v1092, %v1201
      %v1268 = vadd.f32 %v1093, %v1203
      %v1269 = vadd.f32 %v1094, %v1253
      %v1270 = vadd.f32 %v1095, %v1207
      %v1271 = vadd.f32 %v1096, %v1209
      %v1272 = vadd.f32 %v1097, %v1258
      %v1273 = vadd.f32 %v1098, %v1211
      %v1274 = vadd.f32 %v1099, %v1213
      %v1275 = vadd.f32 %v1100, %v1261
      %v1276 = vld [vmem:[%s251] sm:$0xff]
      %s1277 = scalar_lea.vmem %s1, 96
      %v1278 = vld [vmem:[%s1277] sm:$0xf]
      %v1279 = vld [vmem:[%s1277 + $0x4] sm:$0xf]
      %v1280 = vld [vmem:[%s1277 + $0x8] sm:$0xf]
      %v1281 = vld [vmem:[%s1277 + $0xc] sm:$0xf]
      %v1286 = vunpack.c.l.b16 %v1278
      %v1287 = vunpack.c.l.b16 %v1279
      %v1288 = vunpack.c.l.b16 %v1280
      %v1289 = vunpack.c.l.b16 %v1281
      %v1290 = vpack.c.b16 %v1287, %v1286
      %v1291 = vpack.c.b16 %v1289, %v1288
      %v1293 = vcombine.high %v1276, %v1276
      %v1295 = vunpack.c.l.s4 1983009808
      %v1296 = vunpack.c.0.s8 %v1295
      %v1297 = vlaneseq
      %v1298 = vshrl.u32 %v1297, 7
      %v1299 = vsub.s32 %v1296, %v1298
      %v1300 = vrot.slane %v1276, %v1299
      %v1302 = vunpack.c.l.s4 1983009808
      %v1303 = vunpack.c.0.s8 %v1302
      %v1304 = vlaneseq
      %v1305 = vshrl.u32 %v1304, 7
      %v1306 = vsub.s32 %v1303, %v1305
      %v1307 = vrot.slane %v1293, %v1306
      %v1308 = vcombine.high %v1300, %v1300
      %v1309 = vcombine.high %v1307, %v1307
      %1310 = vrot.lane.b32.xlu0 %v1300, 92
      %v1311 = vpop.permute.xlu0 %1310
      %1312 = vrot.lane.b32.xlu0 %v1308, 92
      %v1313 = vpop.permute.xlu0 %1312
      %1314 = vrot.lane.b32.xlu0 %v1307, 92
      %v1315 = vpop.permute.xlu0 %1314
      %1316 = vrot.lane.b32.xlu0 %v1309, 92
      %v1317 = vpop.permute.xlu0 %1316
      %vm1318 = vcmask 752640
      %v1319 = vsel %vm1318, %v1311, %v1313
      %v1320 = vsel %vm1318, %v1313, %v1315
      %v1321 = vsel %vm1318, %v1315, %v1317
      %v1323 = vsel %vm313, %v1290, 0
      %v1326 = vsel %vm313, %v1291, 0
      %v1329 = vsel %vm320, %v1319, 0
      %v1332 = vsel %vm320, %v1320, 0
      %v1335 = vsel %vm320, %v1321, 0
      %1337 = vmatprep.subr.bf16.mxu0 %v1332
      %1338 = vmatpush1.bf16.msra.mxu0 %v1329
      %1339 = vmatprep.subr.bf16.mxu0 0
      %1340 = vmatpush1.bf16.msra.mxu0 0
      %1341 = vmatprep.subr.bf16.mxu0 0
      %1342 = vmatpush1.bf16.msra.mxu0 0
      %1343 = vmatprep.subr.bf16.mxu0 0
      %1344 = vmatpush1.bf16.msra.mxu0 0
      %1345 = vmatprep.subr.bf16.mxu0 0
      %1346 = vmatpush1.bf16.msra.mxu0 0
      %1347 = vmatprep.subr.bf16.mxu0 0
      %1348 = vmatpush1.bf16.msra.mxu0 0
      %1349 = vmatprep.subr.bf16.mxu0 0
      %1350 = vmatpush1.bf16.msra.mxu0 0
      %1351 = vmatprep.subr.bf16.mxu0 0
      %1352 = vmatpush1.bf16.msra.mxu0 0
      %1353 = vmatprep.subr.bf16.mxu0 0
      %1354 = vmatpush1.bf16.msra.mxu0 0
      %1355 = vmatprep.subr.bf16.mxu0 0
      %1356 = vmatpush1.bf16.msra.mxu0 0
      %1357 = vmatprep.subr.bf16.mxu0 0
      %1358 = vmatpush1.bf16.msra.mxu0 0
      %1359 = vmatprep.subr.bf16.mxu0 0
      %1360 = vmatpush1.bf16.msra.mxu0 0
      %1361 = vmatprep.subr.bf16.mxu0 0
      %1362 = vmatpush1.bf16.msra.mxu0 0
      %1363 = vmatprep.subr.bf16.mxu0 0
      %1364 = vmatpush1.bf16.msra.mxu0 0
      %1365 = vmatprep.subr.bf16.mxu0 0
      %1366 = vmatpush1.bf16.msra.mxu0 0
      %1367 = vmatprep.subr.bf16.mxu0 0
      %1368 = vmatpush1.bf16.msra.mxu0 0
      %1369 = vmatprep.mubr.bf16.mxu0 0
      %1370 = vmatmul.mubr.bf16.gmra.mrb[0].mxu0 %v1323
      %v1371 = vpop.f32.mrb[0].mxu0
      %v1372 = vadd.f32 0.0, %v1371
      %v1373 = vpop.f32.mrb[0].mxu0
      %v1374 = vadd.f32 0.0, %v1373
      %v1375 = vpop.f32.mrb[0].mxu0
      %v1376 = vadd.f32 0.0, %v1375
      %v1377 = vpop.f32.mrb[0].mxu0
      %v1378 = vadd.f32 0.0, %v1377
      %1379 = vmatprep.mubr.bf16.mxu0 0
      %1380 = vmatmul.mubr.bf16.gmra.mrb[0].mxu0 %v1326
      %v1381 = vpop.f32.mrb[0].mxu0
      %v1382 = vadd.f32 0.0, %v1381
      %v1383 = vpop.f32.mrb[0].mxu0
      %v1384 = vadd.f32 0.0, %v1383
      %v1385 = vpop.f32.mrb[0].mxu0
      %v1386 = vadd.f32 0.0, %v1385
      %v1387 = vpop.f32.mrb[0].mxu0
      %v1388 = vadd.f32 0.0, %v1387
      %1389 = vdwg.mxu0
      %1390 = vmatprep.subr.bf16.mxu0 0
      %1391 = vmatpush1.bf16.msra.mxu0 %v1335
      %1392 = vmatprep.subr.bf16.mxu0 0
      %1393 = vmatpush1.bf16.msra.mxu0 0
      %1394 = vmatprep.subr.bf16.mxu0 0
      %1395 = vmatpush1.bf16.msra.mxu0 0
      %1396 = vmatprep.subr.bf16.mxu0 0
      %1397 = vmatpush1.bf16.msra.mxu0 0
      %1398 = vmatprep.subr.bf16.mxu0 0
      %1399 = vmatpush1.bf16.msra.mxu0 0
      %1400 = vmatprep.subr.bf16.mxu0 0
      %1401 = vmatpush1.bf16.msra.mxu0 0
      %1402 = vmatprep.subr.bf16.mxu0 0
      %1403 = vmatpush1.bf16.msra.mxu0 0
      %1404 = vmatprep.subr.bf16.mxu0 0
      %1405 = vmatpush1.bf16.msra.mxu0 0
      %1406 = vmatprep.subr.bf16.mxu0 0
      %1407 = vmatpush1.bf16.msra.mxu0 0
      %1408 = vmatprep.subr.bf16.mxu0 0
      %1409 = vmatpush1.bf16.msra.mxu0 0
      %1410 = vmatprep.subr.bf16.mxu0 0
      %1411 = vmatpush1.bf16.msra.mxu0 0
      %1412 = vmatprep.subr.bf16.mxu0 0
      %1413 = vmatpush1.bf16.msra.mxu0 0
      %1414 = vmatprep.subr.bf16.mxu0 0
      %1415 = vmatpush1.bf16.msra.mxu0 0
      %1416 = vmatprep.subr.bf16.mxu0 0
      %1417 = vmatpush1.bf16.msra.mxu0 0
      %1418 = vmatprep.subr.bf16.mxu0 0
      %1419 = vmatpush1.bf16.msra.mxu0 0
      %1420 = vmatprep.subr.bf16.mxu0 0
      %1421 = vmatpush1.bf16.msra.mxu0 0
      %1422 = vmatprep.mubr.bf16.mxu0 0
      %1423 = vmatmul.mubr.bf16.gmra.mrb[0].mxu0 %v1323
      %v1424 = vpop.f32.mrb[0].mxu0
      %v1425 = vadd.f32 0.0, %v1424
      %v1426 = vpop.f32.mrb[0].mxu0
      %v1427 = vpop.f32.mrb[0].mxu0
      %v1428 = vadd.f32 0.0, %v1427
      %v1429 = vpop.f32.mrb[0].mxu0
      %1430 = vmatprep.mubr.bf16.mxu0 0
      %1431 = vmatmul.mubr.bf16.gmra.mrb[0].mxu0 %v1326
      %v1432 = vpop.f32.mrb[0].mxu0
      %v1433 = vadd.f32 0.0, %v1432
      %v1434 = vpop.f32.mrb[0].mxu0
      %v1435 = vpop.f32.mrb[0].mxu0
      %v1436 = vadd.f32 0.0, %v1435
      %v1437 = vpop.f32.mrb[0].mxu0
      %1438 = vdwg.mxu0
      %v1439 = vadd.f32 %v1264, %v1372
      %v1440 = vadd.f32 %v1265, %v1374
      %v1441 = vadd.f32 %v1266, %v1425
      %v1442 = vadd.f32 %v1267, %v1376
      %v1443 = vadd.f32 %v1268, %v1378
      %v1444 = vadd.f32 %v1269, %v1428
      %v1445 = vadd.f32 %v1270, %v1382
      %v1446 = vadd.f32 %v1271, %v1384
      %v1447 = vadd.f32 %v1272, %v1433
      %v1448 = vadd.f32 %v1273, %v1386
      %v1449 = vadd.f32 %v1274, %v1388
      %v1450 = vadd.f32 %v1275, %v1436
      %v1451 = vld [vmem:[%s251] sm:$0xff]
      %s1452 = scalar_lea.vmem %s1, 112
      %v1453 = vld [vmem:[%s1452] sm:$0xf]
      %v1454 = vld [vmem:[%s1452 + $0x4] sm:$0xf]
      %v1455 = vld [vmem:[%s1452 + $0x8] sm:$0xf]
      %v1456 = vld [vmem:[%s1452 + $0xc] sm:$0xf]
      %v1461 = vunpack.c.l.b16 %v1453
      %v1462 = vunpack.c.l.b16 %v1454
      %v1463 = vunpack.c.l.b16 %v1455
      %v1464 = vunpack.c.l.b16 %v1456
      %v1465 = vpack.c.b16 %v1462, %v1461
      %v1466 = vpack.c.b16 %v1464, %v1463
      %v1468 = vcombine.high %v1451, %v1451
      %v1470 = vunpack.c.l.s4 1983009808
      %v1471 = vunpack.c.0.s8 %v1470
      %v1472 = vlaneseq
      %v1473 = vshrl.u32 %v1472, 7
      %v1474 = vsub.s32 %v1471, %v1473
      %v1475 = vrot.slane %v1451, %v1474
      %v1477 = vunpack.c.l.s4 1983009808
      %v1478 = vunpack.c.0.s8 %v1477
      %v1479 = vlaneseq
      %v1480 = vshrl.u32 %v1479, 7
      %v1481 = vsub.s32 %v1478, %v1480
      %v1482 = vrot.slane %v1468, %v1481
      %v1483 = vcombine.high %v1475, %v1475
      %v1484 = vcombine.high %v1482, %v1482
      %1485 = vrot.lane.b32.xlu0 %v1475, 91
      %v1486 = vpop.permute.xlu0 %1485
      %1487 = vrot.lane.b32.xlu0 %v1483, 91
      %v1488 = vpop.permute.xlu0 %1487
      %1489 = vrot.lane.b32.xlu0 %v1482, 91
      %v1490 = vpop.permute.xlu0 %1489
      %1491 = vrot.lane.b32.xlu0 %v1484, 91
      %v1492 = vpop.permute.xlu0 %1491
      %vm1493 = vcmask 744448
      %v1494 = vsel %vm1493, %v1486, %v1488
      %v1495 = vsel %vm1493, %v1488, %v1490
      %v1496 = vsel %vm1493, %v1490, %v1492
      %v1498 = vsel %vm313, %v1465, 0
      %v1501 = vsel %vm313, %v1466, 0
      %v1504 = vsel %vm320, %v1494, 0
      %v1507 = vsel %vm320, %v1495, 0
      %v1510 = vsel %vm320, %v1496, 0
      %1512 = vmatprep.subr.bf16.mxu0 %v1507
      %1513 = vmatpush1.bf16.msra.mxu0 %v1504
      %1514 = vmatprep.subr.bf16.mxu0 0
      %1515 = vmatpush1.bf16.msra.mxu0 0
      %1516 = vmatprep.subr.bf16.mxu0 0
      %1517 = vmatpush1.bf16.msra.mxu0 0
      %1518 = vmatprep.subr.bf16.mxu0 0
      %1519 = vmatpush1.bf16.msra.mxu0 0
      %1520 = vmatprep.subr.bf16.mxu0 0
      %1521 = vmatpush1.bf16.msra.mxu0 0
      %1522 = vmatprep.subr.bf16.mxu0 0
      %1523 = vmatpush1.bf16.msra.mxu0 0
      %1524 = vmatprep.subr.bf16.mxu0 0
      %1525 = vmatpush1.bf16.msra.mxu0 0
      %1526 = vmatprep.subr.bf16.mxu0 0
      %1527 = vmatpush1.bf16.msra.mxu0 0
      %1528 = vmatprep.subr.bf16.mxu0 0
      %1529 = vmatpush1.bf16.msra.mxu0 0
      %1530 = vmatprep.subr.bf16.mxu0 0
      %1531 = vmatpush1.bf16.msra.mxu0 0
      %1532 = vmatprep.subr.bf16.mxu0 0
      %1533 = vmatpush1.bf16.msra.mxu0 0
      %1534 = vmatprep.subr.bf16.mxu0 0
      %1535 = vmatpush1.bf16.msra.mxu0 0
      %1536 = vmatprep.subr.bf16.mxu0 0
      %1537 = vmatpush1.bf16.msra.mxu0 0
      %1538 = vmatprep.subr.bf16.mxu0 0
      %1539 = vmatpush1.bf16.msra.mxu0 0
      %1540 = vmatprep.subr.bf16.mxu0 0
      %1541 = vmatpush1.bf16.msra.mxu0 0
      %1542 = vmatprep.subr.bf16.mxu0 0
      %1543 = vmatpush1.bf16.msra.mxu0 0
      %1544 = vmatprep.mubr.bf16.mxu0 0
      %1545 = vmatmul.mubr.bf16.gmra.mrb[0].mxu0 %v1498
      %v1546 = vpop.f32.mrb[0].mxu0
      %v1547 = vadd.f32 0.0, %v1546
      %v1548 = vpop.f32.mrb[0].mxu0
      %v1549 = vadd.f32 0.0, %v1548
      %v1550 = vpop.f32.mrb[0].mxu0
      %v1551 = vadd.f32 0.0, %v1550
      %v1552 = vpop.f32.mrb[0].mxu0
      %v1553 = vadd.f32 0.0, %v1552
      %1554 = vmatprep.mubr.bf16.mxu0 0
      %1555 = vmatmul.mubr.bf16.gmra.mrb[0].mxu0 %v1501
      %v1556 = vpop.f32.mrb[0].mxu0
      %v1557 = vadd.f32 0.0, %v1556
      %v1558 = vpop.f32.mrb[0].mxu0
      %v1559 = vadd.f32 0.0, %v1558
      %v1560 = vpop.f32.mrb[0].mxu0
      %v1561 = vadd.f32 0.0, %v1560
      %v1562 = vpop.f32.mrb[0].mxu0
      %v1563 = vadd.f32 0.0, %v1562
      %1564 = vdwg.mxu0
      %1565 = vmatprep.subr.bf16.mxu0 0
      %1566 = vmatpush1.bf16.msra.mxu0 %v1510
      %1567 = vmatprep.subr.bf16.mxu0 0
      %1568 = vmatpush1.bf16.msra.mxu0 0
      %1569 = vmatprep.subr.bf16.mxu0 0
      %1570 = vmatpush1.bf16.msra.mxu0 0
      %1571 = vmatprep.subr.bf16.mxu0 0
      %1572 = vmatpush1.bf16.msra.mxu0 0
      %1573 = vmatprep.subr.bf16.mxu0 0
      %1574 = vmatpush1.bf16.msra.mxu0 0
      %1575 = vmatprep.subr.bf16.mxu0 0
      %1576 = vmatpush1.bf16.msra.mxu0 0
      %1577 = vmatprep.subr.bf16.mxu0 0
      %1578 = vmatpush1.bf16.msra.mxu0 0
      %1579 = vmatprep.subr.bf16.mxu0 0
      %1580 = vmatpush1.bf16.msra.mxu0 0
      %1581 = vmatprep.subr.bf16.mxu0 0
      %1582 = vmatpush1.bf16.msra.mxu0 0
      %1583 = vmatprep.subr.bf16.mxu0 0
      %1584 = vmatpush1.bf16.msra.mxu0 0
      %1585 = vmatprep.subr.bf16.mxu0 0
      %1586 = vmatpush1.bf16.msra.mxu0 0
      %1587 = vmatprep.subr.bf16.mxu0 0
      %1588 = vmatpush1.bf16.msra.mxu0 0
      %1589 = vmatprep.subr.bf16.mxu0 0
      %1590 = vmatpush1.bf16.msra.mxu0 0
      %1591 = vmatprep.subr.bf16.mxu0 0
      %1592 = vmatpush1.bf16.msra.mxu0 0
      %1593 = vmatprep.subr.bf16.mxu0 0
      %1594 = vmatpush1.bf16.msra.mxu0 0
      %1595 = vmatprep.subr.bf16.mxu0 0
      %1596 = vmatpush1.bf16.msra.mxu0 0
      %1597 = vmatprep.mubr.bf16.mxu0 0
      %1598 = vmatmul.mubr.bf16.gmra.mrb[0].mxu0 %v1498
      %v1599 = vpop.f32.mrb[0].mxu0
      %v1600 = vadd.f32 0.0, %v1599
      %v1601 = vpop.f32.mrb[0].mxu0
      %v1602 = vpop.f32.mrb[0].mxu0
      %v1603 = vadd.f32 0.0, %v1602
      %v1604 = vpop.f32.mrb[0].mxu0
      %1605 = vmatprep.mubr.bf16.mxu0 0
      %1606 = vmatmul.mubr.bf16.gmra.mrb[0].mxu0 %v1501
      %v1607 = vpop.f32.mrb[0].mxu0
      %v1608 = vadd.f32 0.0, %v1607
      %v1609 = vpop.f32.mrb[0].mxu0
      %v1610 = vpop.f32.mrb[0].mxu0
      %v1611 = vadd.f32 0.0, %v1610
      %v1612 = vpop.f32.mrb[0].mxu0
      %1613 = vdwg.mxu0
      %v1614 = vadd.f32 %v1439, %v1547
      %v1615 = vadd.f32 %v1440, %v1549
      %v1616 = vadd.f32 %v1441, %v1600
      %v1617 = vadd.f32 %v1442, %v1551
      %v1618 = vadd.f32 %v1443, %v1553
      %v1619 = vadd.f32 %v1444, %v1603
      %v1620 = vadd.f32 %v1445, %v1557
      %v1621 = vadd.f32 %v1446, %v1559
      %v1622 = vadd.f32 %v1447, %v1608
      %v1623 = vadd.f32 %v1448, %v1561
      %v1624 = vadd.f32 %v1449, %v1563
      %v1625 = vadd.f32 %v1450, %v1611
      %v1626 = vld [vmem:[%s251] sm:$0xff]
      %s1627 = scalar_lea.vmem %s1, 128
      %v1628 = vld [vmem:[%s1627] sm:$0xf]
      %v1629 = vld [vmem:[%s1627 + $0x4] sm:$0xf]
      %v1630 = vld [vmem:[%s1627 + $0x8] sm:$0xf]
      %v1631 = vld [vmem:[%s1627 + $0xc] sm:$0xf]
      %v1636 = vunpack.c.l.b16 %v1628
      %v1637 = vunpack.c.l.b16 %v1629
      %v1638 = vunpack.c.l.b16 %v1630
      %v1639 = vunpack.c.l.b16 %v1631
      %v1640 = vpack.c.b16 %v1637, %v1636
      %v1641 = vpack.c.b16 %v1639, %v1638
      %v1643 = vcombine.high %v1626, %v1626
      %v1645 = vunpack.c.l.s4 1983009808
      %v1646 = vunpack.c.0.s8 %v1645
      %v1647 = vlaneseq
      %v1648 = vshrl.u32 %v1647, 7
      %v1649 = vsub.s32 %v1646, %v1648
      %v1650 = vrot.slane %v1626, %v1649
      %v1652 = vunpack.c.l.s4 1983009808
      %v1653 = vunpack.c.0.s8 %v1652
      %v1654 = vlaneseq
      %v1655 = vshrl.u32 %v1654, 7
      %v1656 = vsub.s32 %v1653, %v1655
      %v1657 = vrot.slane %v1643, %v1656
      %v1658 = vcombine.high %v1650, %v1650
      %v1659 = vcombine.high %v1657, %v1657
      %1660 = vrot.lane.b32.xlu0 %v1650, 90
      %v1661 = vpop.permute.xlu0 %1660
      %1662 = vrot.lane.b32.xlu0 %v1658, 90
      %v1663 = vpop.permute.xlu0 %1662
      %1664 = vrot.lane.b32.xlu0 %v1657, 90
      %v1665 = vpop.permute.xlu0 %1664
      %1666 = vrot.lane.b32.xlu0 %v1659, 90
      %v1667 = vpop.permute.xlu0 %1666
      %vm1668 = vcmask 736256
      %v1669 = vsel %vm1668, %v1661, %v1663
      %v1670 = vsel %vm1668, %v1663, %v1665
      %v1671 = vsel %vm1668, %v1665, %v1667
      %v1673 = vsel %vm313, %v1640, 0
      %v1676 = vsel %vm313, %v1641, 0
      %v1679 = vsel %vm320, %v1669, 0
      %v1682 = vsel %vm320, %v1670, 0
      %v1685 = vsel %vm320, %v1671, 0
      %1687 = vmatprep.subr.bf16.mxu0 %v1682
      %1688 = vmatpush1.bf16.msra.mxu0 %v1679
      %1689 = vmatprep.subr.bf16.mxu0 0
      %1690 = vmatpush1.bf16.msra.mxu0 0
      %1691 = vmatprep.subr.bf16.mxu0 0
      %1692 = vmatpush1.bf16.msra.mxu0 0
      %1693 = vmatprep.subr.bf16.mxu0 0
      %1694 = vmatpush1.bf16.msra.mxu0 0
      %1695 = vmatprep.subr.bf16.mxu0 0
      %1696 = vmatpush1.bf16.msra.mxu0 0
      %1697 = vmatprep.subr.bf16.mxu0 0
      %1698 = vmatpush1.bf16.msra.mxu0 0
      %1699 = vmatprep.subr.bf16.mxu0 0
      %1700 = vmatpush1.bf16.msra.mxu0 0
      %1701 = vmatprep.subr.bf16.mxu0 0
      %1702 = vmatpush1.bf16.msra.mxu0 0
      %1703 = vmatprep.subr.bf16.mxu0 0
      %1704 = vmatpush1.bf16.msra.mxu0 0
      %1705 = vmatprep.subr.bf16.mxu0 0
      %1706 = vmatpush1.bf16.msra.mxu0 0
      %1707 = vmatprep.subr.bf16.mxu0 0
      %1708 = vmatpush1.bf16.msra.mxu0 0
      %1709 = vmatprep.subr.bf16.mxu0 0
      %1710 = vmatpush1.bf16.msra.mxu0 0
      %1711 = vmatprep.subr.bf16.mxu0 0
      %1712 = vmatpush1.bf16.msra.mxu0 0
      %1713 = vmatprep.subr.bf16.mxu0 0
      %1714 = vmatpush1.bf16.msra.mxu0 0
      %1715 = vmatprep.subr.bf16.mxu0 0
      %1716 = vmatpush1.bf16.msra.mxu0 0
      %1717 = vmatprep.subr.bf16.mxu0 0
      %1718 = vmatpush1.bf16.msra.mxu0 0
      %1719 = vmatprep.mubr.bf16.mxu0 0
      %1720 = vmatmul.mubr.bf16.gmra.mrb[0].mxu0 %v1673
      %v1721 = vpop.f32.mrb[0].mxu0
      %v1722 = vadd.f32 0.0, %v1721
      %v1723 = vpop.f32.mrb[0].mxu0
      %v1724 = vadd.f32 0.0, %v1723
      %v1725 = vpop.f32.mrb[0].mxu0
      %v1726 = vadd.f32 0.0, %v1725
      %v1727 = vpop.f32.mrb[0].mxu0
      %v1728 = vadd.f32 0.0, %v1727
      %1729 = vmatprep.mubr.bf16.mxu0 0
      %1730 = vmatmul.mubr.bf16.gmra.mrb[0].mxu0 %v1676
      %v1731 = vpop.f32.mrb[0].mxu0
      %v1732 = vadd.f32 0.0, %v1731
      %v1733 = vpop.f32.mrb[0].mxu0
      %v1734 = vadd.f32 0.0, %v1733
      %v1735 = vpop.f32.mrb[0].mxu0
      %v1736 = vadd.f32 0.0, %v1735
      %v1737 = vpop.f32.mrb[0].mxu0
      %v1738 = vadd.f32 0.0, %v1737
      %1739 = vdwg.mxu0
      %1740 = vmatprep.subr.bf16.mxu0 0
      %1741 = vmatpush1.bf16.msra.mxu0 %v1685
      %1742 = vmatprep.subr.bf16.mxu0 0
      %1743 = vmatpush1.bf16.msra.mxu0 0
      %1744 = vmatprep.subr.bf16.mxu0 0
      %1745 = vmatpush1.bf16.msra.mxu0 0
      %1746 = vmatprep.subr.bf16.mxu0 0
      %1747 = vmatpush1.bf16.msra.mxu0 0
      %1748 = vmatprep.subr.bf16.mxu0 0
      %1749 = vmatpush1.bf16.msra.mxu0 0
      %1750 = vmatprep.subr.bf16.mxu0 0
      %1751 = vmatpush1.bf16.msra.mxu0 0
      %1752 = vmatprep.subr.bf16.mxu0 0
      %1753 = vmatpush1.bf16.msra.mxu0 0
      %1754 = vmatprep.subr.bf16.mxu0 0
      %1755 = vmatpush1.bf16.msra.mxu0 0
      %1756 = vmatprep.subr.bf16.mxu0 0
      %1757 = vmatpush1.bf16.msra.mxu0 0
      %1758 = vmatprep.subr.bf16.mxu0 0
      %1759 = vmatpush1.bf16.msra.mxu0 0
      %1760 = vmatprep.subr.bf16.mxu0 0
      %1761 = vmatpush1.bf16.msra.mxu0 0
      %1762 = vmatprep.subr.bf16.mxu0 0
      %1763 = vmatpush1.bf16.msra.mxu0 0
      %1764 = vmatprep.subr.bf16.mxu0 0
      %1765 = vmatpush1.bf16.msra.mxu0 0
      %1766 = vmatprep.subr.bf16.mxu0 0
      %1767 = vmatpush1.bf16.msra.mxu0 0
      %1768 = vmatprep.subr.bf16.mxu0 0
      %1769 = vmatpush1.bf16.msra.mxu0 0
      %1770 = vmatprep.subr.bf16.mxu0 0
      %1771 = vmatpush1.bf16.msra.mxu0 0
      %1772 = vmatprep.mubr.bf16.mxu0 0
      %1773 = vmatmul.mubr.bf16.gmra.mrb[0].mxu0 %v1673
      %v1774 = vpop.f32.mrb[0].mxu0
      %v1775 = vadd.f32 0.0, %v1774
      %v1776 = vpop.f32.mrb[0].mxu0
      %v1777 = vpop.f32.mrb[0].mxu0
      %v1778 = vadd.f32 0.0, %v1777
      %v1779 = vpop.f32.mrb[0].mxu0
      %1780 = vmatprep.mubr.bf16.mxu0 0
      %1781 = vmatmul.mubr.bf16.gmra.mrb[0].mxu0 %v1676
      %v1782 = vpop.f32.mrb[0].mxu0
      %v1783 = vadd.f32 0.0, %v1782
      %v1784 = vpop.f32.mrb[0].mxu0
      %v1785 = vpop.f32.mrb[0].mxu0
      %v1786 = vadd.f32 0.0, %v1785
      %v1787 = vpop.f32.mrb[0].mxu0
      %1788 = vdwg.mxu0
      %v1789 = vadd.f32 %v1614, %v1722
      %v1790 = vadd.f32 %v1615, %v1724
      %v1791 = vadd.f32 %v1616, %v1775
      %v1792 = vadd.f32 %v1617, %v1726
      %v1793 = vadd.f32 %v1618, %v1728
      %v1794 = vadd.f32 %v1619, %v1778
      %v1795 = vadd.f32 %v1620, %v1732
      %v1796 = vadd.f32 %v1621, %v1734
      %v1797 = vadd.f32 %v1622, %v1783
      %v1798 = vadd.f32 %v1623, %v1736
      %v1799 = vadd.f32 %v1624, %v1738
      %v1800 = vadd.f32 %v1625, %v1786
      %v1801 = vld [vmem:[%s2] sm:$0xff]
      %v1802 = vld [vmem:[%s2 + $0x8] sm:$0xff]
      %v1803 = vld [vmem:[%s2 + $0x10] sm:$0xff]
      %v1804 = vld [vmem:[%s2 + $0x18] sm:$0xff]
      %1806 = vset.pattern.permute.xlu0 0
      %1807 = vperm.xlu0 %1806, %v1801
      %v1808 = vpop.permute.xlu0 %1807
      %1811 = vset.pattern.permute.xlu0 0
      %1812 = vperm.xlu0 %1811, %v1802
      %v1813 = vpop.permute.xlu0 %1812
      %1816 = vset.pattern.permute.xlu0 0
      %1817 = vperm.xlu0 %1816, %v1803
      %v1818 = vpop.permute.xlu0 %1817
      %1821 = vset.pattern.permute.xlu0 0
      %1822 = vperm.xlu0 %1821, %v1804
      %v1823 = vpop.permute.xlu0 %1822
      %v1825 = vadd.f32 %v1789, %v1808
      %v1826 = vadd.f32 %v1790, %v1808
      %v1827 = vadd.f32 %v1791, %v1808
      %v1828 = vadd.f32 %v1792, %v1813
      %v1829 = vadd.f32 %v1793, %v1813
      %v1830 = vadd.f32 %v1794, %v1813
      %v1831 = vadd.f32 %v1795, %v1818
      %v1832 = vadd.f32 %v1796, %v1818
      %v1833 = vadd.f32 %v1797, %v1818
      %v1834 = vadd.f32 %v1798, %v1823
      %v1835 = vadd.f32 %v1799, %v1823
      %v1836 = vadd.f32 %v1800, %v1823
      %v1837 = vmax.f32 %v1825, 0.0
      %v1838 = vmax.f32 %v1826, 0.0
      %v1839 = vmax.f32 %v1827, 0.0
      %v1840 = vmax.f32 %v1828, 0.0
      %v1841 = vmax.f32 %v1829, 0.0
      %v1842 = vmax.f32 %v1830, 0.0
      %v1843 = vmax.f32 %v1831, 0.0
      %v1844 = vmax.f32 %v1832, 0.0
      %v1845 = vmax.f32 %v1833, 0.0
      %v1846 = vmax.f32 %v1834, 0.0
      %v1847 = vmax.f32 %v1835, 0.0
      %v1848 = vmax.f32 %v1836, 0.0
      %v1849 = vld [vmem:[%s3] sm:$0xf]
      %v1850 = vpack.c.bf16 %v1840, %v1837
      %v1851 = vpack.c.bf16 %v1841, %v1838
      %v1852 = vpack.c.bf16 %v1842, %v1839
      %v1853 = vpack.c.bf16 %v1846, %v1843
      %v1854 = vpack.c.bf16 %v1847, %v1844
      %v1855 = vpack.c.bf16 %v1848, %v1845
      %v1856 = vld [vmem:[%s4] sm:$0xff]
      %1858 = vset.pattern.permute.xlu0 0
      %1859 = vperm.xlu0 %1858, %v1856
      %v1860 = vpop.permute.xlu0 %1859
      %vm1862 = vcmask 261120
      %v1864 = vsel %vm1862, %v1849, 0
      %1866 = vmatprep.subr.bf16.mxu0 %v1851
      %1867 = vmatpush1.bf16.msra.mxu0 %v1850
      %1868 = vmatprep.subr.bf16.mxu0 %v1854
      %1869 = vmatpush1.bf16.msra.mxu0 %v1853
      %1870 = vmatprep.subr.bf16.mxu0 0
      %1871 = vmatpush1.bf16.msra.mxu0 0
      %1872 = vmatprep.subr.bf16.mxu0 0
      %1873 = vmatpush1.bf16.msra.mxu0 0
      %1874 = vmatprep.subr.bf16.mxu0 0
      %1875 = vmatpush1.bf16.msra.mxu0 0
      %1876 = vmatprep.subr.bf16.mxu0 0
      %1877 = vmatpush1.bf16.msra.mxu0 0
      %1878 = vmatprep.subr.bf16.mxu0 0
      %1879 = vmatpush1.bf16.msra.mxu0 0
      %1880 = vmatprep.subr.bf16.mxu0 0
      %1881 = vmatpush1.bf16.msra.mxu0 0
      %1882 = vmatprep.subr.bf16.mxu0 0
      %1883 = vmatpush1.bf16.msra.mxu0 0
      %1884 = vmatprep.subr.bf16.mxu0 0
      %1885 = vmatpush1.bf16.msra.mxu0 0
      %1886 = vmatprep.subr.bf16.mxu0 0
      %1887 = vmatpush1.bf16.msra.mxu0 0
      %1888 = vmatprep.subr.bf16.mxu0 0
      %1889 = vmatpush1.bf16.msra.mxu0 0
      %1890 = vmatprep.subr.bf16.mxu0 0
      %1891 = vmatpush1.bf16.msra.mxu0 0
      %1892 = vmatprep.subr.bf16.mxu0 0
      %1893 = vmatpush1.bf16.msra.mxu0 0
      %1894 = vmatprep.subr.bf16.mxu0 0
      %1895 = vmatpush1.bf16.msra.mxu0 0
      %1896 = vmatprep.subr.bf16.mxu0 0
      %1897 = vmatpush1.bf16.msra.mxu0 0
      %1898 = vmatprep.mubr.bf16.mxu0 0
      %1899 = vmatmul.mubr.bf16.gmra.mrb[0].mxu0 %v1864
      %v1900 = vpop.f32.mrb[0].mxu0
      %v1901 = vadd.f32 %v1860, %v1900
      %v1902 = vpop.f32.mrb[0].mxu0
      %v1903 = vadd.f32 %v1860, %v1902
      %v1904 = vpop.f32.mrb[0].mxu0
      %v1905 = vpop.f32.mrb[0].mxu0
      %1906 = vdwg.mxu0
      %1907 = vmatprep.subr.bf16.mxu0 0
      %1908 = vmatpush1.bf16.msra.mxu0 %v1852
      %1909 = vmatprep.subr.bf16.mxu0 0
      %1910 = vmatpush1.bf16.msra.mxu0 %v1855
      %1911 = vmatprep.subr.bf16.mxu0 0
      %1912 = vmatpush1.bf16.msra.mxu0 0
      %1913 = vmatprep.subr.bf16.mxu0 0
      %1914 = vmatpush1.bf16.msra.mxu0 0
      %1915 = vmatprep.subr.bf16.mxu0 0
      %1916 = vmatpush1.bf16.msra.mxu0 0
      %1917 = vmatprep.subr.bf16.mxu0 0
      %1918 = vmatpush1.bf16.msra.mxu0 0
      %1919 = vmatprep.subr.bf16.mxu0 0
      %1920 = vmatpush1.bf16.msra.mxu0 0
      %1921 = vmatprep.subr.bf16.mxu0 0
      %1922 = vmatpush1.bf16.msra.mxu0 0
      %1923 = vmatprep.subr.bf16.mxu0 0
      %1924 = vmatpush1.bf16.msra.mxu0 0
      %1925 = vmatprep.subr.bf16.mxu0 0
      %1926 = vmatpush1.bf16.msra.mxu0 0
      %1927 = vmatprep.subr.bf16.mxu0 0
      %1928 = vmatpush1.bf16.msra.mxu0 0
      %1929 = vmatprep.subr.bf16.mxu0 0
      %1930 = vmatpush1.bf16.msra.mxu0 0
      %1931 = vmatprep.subr.bf16.mxu0 0
      %1932 = vmatpush1.bf16.msra.mxu0 0
      %1933 = vmatprep.subr.bf16.mxu0 0
      %1934 = vmatpush1.bf16.msra.mxu0 0
      %1935 = vmatprep.subr.bf16.mxu0 0
      %1936 = vmatpush1.bf16.msra.mxu0 0
      %1937 = vmatprep.subr.bf16.mxu0 0
      %1938 = vmatpush1.bf16.msra.mxu0 0
      %1939 = vmatprep.mubr.bf16.mxu0 0
      %1940 = vmatmul.mubr.bf16.gmra.mrb[0].mxu0 %v1864
      %v1941 = vpop.f32.mrb[0].mxu0
      %v1942 = vadd.f32 %v1860, %v1941
      %v1943 = vpop.f32.mrb[0].mxu0
      %v1944 = vpop.f32.mrb[0].mxu0
      %v1945 = vpop.f32.mrb[0].mxu0
      %1946 = vdwg.mxu0
      %1947 = vst [vmem:[%s260] sm:$0xff] %v1901
      %1948 = vst [vmem:[%s260 + $0x8] sm:$0xff] %v1903
      %1949 = vst [vmem:[%s260 + $0x10] sm:$0xff] %v1942
      %p1950 = scmp.lt.s32.totalorder %s20, 1
      %s1951 = scalar_select %p1950, %s20, 1
      %p1952 = scmp.lt.s32.totalorder %s21, 0
      %s1953 = scalar_select %p1952, %s21, 0
      %s1954 = smul.addr %s1953, 3
      %s1955 = smul.addr %s1951, 3
      %s1956 = sadd.s32 %s1954, %s1955
      %s1957 = smul.addr %s1956, 8
      %s1958 = scalar_lea.vmem %s5, %s1957
      // Predicated region
      $region41: #{ctx_aux_head_forward.1} parent=39 // pred_check
        %p1959 = pneg %p160
      $region42: #{ctx_aux_head_forward.1} parent=39 // pred_check_branch
        %1961 = sbr.rel (%p1959) target = $region44
      $region43: #{ctx_aux_head_forward.1} parent=39 // pred_region
        _
      $region44: #{ctx_aux_head_forward.1} parent=39 // pred_fallthru
        _
    $region40: #{ctx_aux_head_forward.1} parent=5 // pred_fallthru
      _
    %p1962 = scmp.le.s32.totalorder 2, %s11
    // Predicated region
    $region45: #{ctx_aux_head_forward.1} parent=5 // pred_check
      %p1963 = pneg %p1962
    $region46: #{ctx_aux_head_forward.1} parent=5 // pred_check_branch
      %1965 = sbr.rel (%p1963) target = $region48
    $region47: #{ctx_aux_head_forward.1} parent=5 // pred_region
      %s1966 = ssub.s32 %s11, 2
      // Predicated region
      $region49: #{ctx_aux_head_forward.1} parent=47 // pred_check
        %p1967 = pneg %p166
      $region50: #{ctx_aux_head_forward.1} parent=47 // pred_check_branch
        %1969 = sbr.rel (%p1967) target = $region52
      $region51: #{ctx_aux_head_forward.1} parent=47 // pred_region
        %p1970 = scmp.lt.s32.totalorder %s22, 1
        %s1971 = scalar_select %p1970, %s22, 1
        %p1972 = scmp.lt.s32.totalorder %s23, 0
        %s1973 = scalar_select %p1972, %s23, 0
        %s1974 = smul.addr %s1973, 3
        %s1975 = smul.addr %s1971, 3
        %s1976 = sadd.s32 %s1974, %s1975
        %s1977 = smul.addr %s1976, 8
        %s1978 = scalar_lea.vmem %s5, %s1977
      $region52: #{ctx_aux_head_forward.1} parent=47 // pred_fallthru
        _
    $region48: #{ctx_aux_head_forward.1} parent=5 // pred_fallthru
      _
  $region6: #{ctx_aux_head_forward.1} parent=0 // loop_footer
    %s15 = sadd.s32 1, %s11
  $region7: #{ctx_aux_head_forward.1} parent=0 // loop_footer_branch
    %10 = sbr.rel target = $region3
  $region8: #{ctx_aux_head_forward.1} parent=0 // loop_exit
    _

</llo_original>
